<compile_context>
chip_gen: v6e
topology: v6e:2x2x1
jax: 0.10.0
libtpu: 0.0.40
codegen_flags: <defaults>
</compile_context>

<pallas_src>
import functools

import jax
import jax.numpy as jnp
from jax import lax
from jax.experimental import pallas as pl
from jax.experimental.pallas import tpu as pltpu


def _round_up(x, m):
    return ((x + m - 1) // m) * m


def construct_affine(theta):
    """theta: (N, 6) = [sx, sy, angle, shear, tx, ty] -> (N, 2, 3) affine rows.

    A = R(angle) @ Shear(m) @ Scale(sx, sy); translation (tx, ty).
    """
    # TODO(synk): construct_affine is not part of the provided spec; this uses
    # the standard T.R.Shear.Scale decomposition consistent with the module's
    # inverse rule (reciprocal scales, negated angle/shear/translation).
    sx, sy, ang, m, tx, ty = (theta[:, i] for i in range(6))
    ca, sa = jnp.cos(ang), jnp.sin(ang)
    a = sx * ca
    b = sy * (m * ca - sa)
    c = sx * sa
    d = sy * (m * sa + ca)
    row0 = jnp.stack([a, b, tx], axis=1)
    row1 = jnp.stack([c, d, ty], axis=1)
    return jnp.stack([row0, row1], axis=1)  # (N, 2, 3)


def _st_affine_kernel(theta_ref, base_ref, x_ref, o_ref, *,
                      Hin, Win, HW, THW, TP, TB, x_resident, use_bf16):
    # theta_ref: (N_pad*6,)              SMEM  flat affine rows [a, b, tx, c, d, ty]
    # base_ref:  (2, TP)                 VMEM  row 0: xb, row 1: yb (base grid tile)
    # x_ref:     (TB, HWt|1, C, THW)     VMEM  flat-spatial input (HW-tile axis 2nd)
    # o_ref:     (TB, C, TP)             VMEM  f32 accumulator across the HW grid axis
    bb = pl.program_id(0)
    hw = pl.program_id(2)

    @pl.when(hw == 0)
    def _():
        o_ref[...] = jnp.zeros_like(o_ref)

    basev = base_ref[...]                       # (2, TP)
    xb = basev[0:1, :]                          # (1, TP)
    yb = basev[1:2, :]

    # Raw local row index within this HW tile (hw*THW is folded into li00 below,
    # saving a full (THW, TP) add and an int32 temp).
    rows = lax.broadcasted_iota(jnp.int32, (THW, TP), 0)

    half_w = 0.5 * Win
    half_h = 0.5 * Hin
    tile_base = hw * THW
    h_idx = hw if x_resident else 0
    cdt = jnp.bfloat16 if use_bf16 else jnp.float32

    def body(t, carry):
        b6 = (bb * TB + t) * 6
        t00 = theta_ref[b6]
        t01 = theta_ref[b6 + 1]
        t02 = theta_ref[b6 + 2]
        t10 = theta_ref[b6 + 3]
        t11 = theta_ref[b6 + 4]
        t12 = theta_ref[b6 + 5]

        # affine grid (align_corners=False base grid is precomputed in xb/yb)
        gx = t00 * xb + t01 * yb + t02
        gy = t10 * xb + t11 * yb + t12
        # grid_sample unnormalize (align_corners=False); divides folded to muls
        ix = gx * half_w + (half_w - 0.5)
        iy = gy * half_h + (half_h - 0.5)

        x0f = jnp.floor(ix)
        y0f = jnp.floor(iy)
        x0 = x0f.astype(jnp.int32)
        y0 = y0f.astype(jnp.int32)
        lx1 = ix - x0f
        lx0 = 1.0 - lx1
        ly1 = iy - y0f
        ly0 = 1.0 - ly1

        # zeros padding: out-of-bounds corners get zero weight (must be kept,
        # otherwise row-wrapped indices would alias into the next row)
        vx0 = (x0 >= 0) & (x0 < Win)
        vx1 = (x0 >= -1) & (x0 < Win - 1)       # validity of x1 = x0 + 1
        vy0 = (y0 >= 0) & (y0 < Hin)
        vy1 = (y0 >= -1) & (y0 < Hin - 1)       # validity of y1 = y0 + 1

        # bf16 weights are cast BEFORE the (THW, TP) selects so M is built
        # directly in the matmul dtype (no post-hoc full-slab cast pass).
        w00 = jnp.where(vx0 & vy0, lx0 * ly0, 0.0).astype(cdt)   # (1, TP)
        w10 = jnp.where(vx1 & vy0, lx1 * ly0, 0.0).astype(cdt)
        w01 = jnp.where(vx0 & vy1, lx0 * ly1, 0.0).astype(cdt)
        w11 = jnp.where(vx1 & vy1, lx1 * ly1, 0.0).astype(cdt)

        li00 = y0 * Win + x0                    # (1, TP) flat index of corner 00

        # Band skip: all nonzero-weight corner indices for this batch/P-tile
        # lie in [min(li00), max(li00) + Win + 1] (clip only widens the band,
        # never drops a valid corner), so skip HW tiles outside that band.
        li_band = jnp.clip(li00, -(Win + 1), HW - 1)
        lo = jnp.min(li_band)
        hi = jnp.max(li_band) + (Win + 1)
        hit = (hi >= tile_base) & (lo < tile_base + THW)

        @pl.when(hit)
        def _():
            # single-difference compare trick: the four corner flat indices are
            # li00 + {0, 1, Win, Win+1} exactly; offsets are mutually exclusive
            # (Win >= 2 is guaranteed by the wrapper) so nested selects suffice.
            dd = rows - (li00 - tile_base)      # (THW, TP)
            zero = jnp.zeros_like(w00)
            m = jnp.where(dd == 0, w00,
                jnp.where(dd == 1, w10,
                jnp.where(dd == Win, w01,
                jnp.where(dd == Win + 1, w11, zero))))

            xm = x_ref[t, h_idx].astype(cdt)    # (C, THW)
            o_ref[t] = o_ref[t] + jnp.dot(xm, m,
                                          preferred_element_type=jnp.float32)

        return carry

    # Short fixed trip count: fori_loop(unroll=True) bounds slab live ranges
    # while keeping the unrolled body visible to the scheduler.
    lax.fori_loop(0, TB, body, None, unroll=True)


def _affine_grid_sample_ref(x, theta_rows, Hout, Wout):
    """Pure-JAX affine_grid + bilinear grid_sample (zeros padding,
    align_corners=False). Also used as the degenerate-width fallback."""
    N, C, Hin, Win = x.shape
    th2 = theta_rows.reshape(N, 2, 3)
    yc = (2.0 * jnp.arange(Hout) + 1.0) / Hout - 1.0
    xc = (2.0 * jnp.arange(Wout) + 1.0) / Wout - 1.0
    X, Y = jnp.meshgrid(xc, yc)                       # (Hout, Wout)
    base = jnp.stack([X, Y, jnp.ones_like(X)], axis=-1)
    grid = jnp.einsum('hwk,njk->nhwj', base, th2)
    gx, gy = grid[..., 0], grid[..., 1]
    ix = ((gx + 1.0) * Win - 1.0) * 0.5
    iy = ((gy + 1.0) * Hin - 1.0) * 0.5
    x0 = jnp.floor(ix)
    y0 = jnp.floor(iy)
    xf = x.reshape(N, C, Hin * Win).astype(jnp.float32)

    def corner(xi, yi, w):
        valid = (xi >= 0) & (xi < Win) & (yi >= 0) & (yi < Hin)
        xg = jnp.clip(xi, 0, Win - 1).astype(jnp.int32)
        yg = jnp.clip(yi, 0, Hin - 1).astype(jnp.int32)
        li = yg * Win + xg
        vals = jax.vmap(lambda xn, ln: xn[:, ln])(xf, li)
        return vals * (w * valid)[:, None, :, :]

    return (corner(x0, y0, (x0 + 1 - ix) * (y0 + 1 - iy))
            + corner(x0 + 1, y0, (ix - x0) * (y0 + 1 - iy))
            + corner(x0, y0 + 1, (x0 + 1 - ix) * (iy - y0))
            + corner(x0 + 1, y0 + 1, (ix - x0) * (iy - y0)))


def st_affine_decomp(x, theta, input_shape, inverse=False, *,
                     tp=None, thw=None, tb=None, use_bf16_matmul=False):
    """Forward of ST_AffineDecomp. x: (N, C, Hin, Win), theta: (N, 6) decomposed."""
    N, C, Hin, Win = x.shape
    Hout, Wout = int(input_shape[1]), int(input_shape[2])

    theta = theta.astype(jnp.float32)
    if inverse:
        theta = jnp.concatenate([1.0 / theta[:, :2], -theta[:, 2:]], axis=1)
    theta_rows = construct_affine(theta).reshape(N, 6)

    if Win < 2:
        # Degenerate width: the corner offsets {0, 1, Win, Win+1} collide and
        # the single-difference trick mis-counts; use the pure-JAX fallback.
        return _affine_grid_sample_ref(x.astype(jnp.float32), theta_rows,
                                       Hout, Wout)

    HW = Hin * Win
    P = Hout * Wout

    # ---- chip-aware tile defaults (v7x: 64 MiB VMEM -> smaller slabs/limit) --
    try:
        vmem_cap = int(pltpu.get_tpu_info().vmem_capacity_bytes)
    except Exception:
        vmem_cap = 64 * 1024 * 1024          # conservative when unknown
    small_vmem = vmem_cap <= 64 * 1024 * 1024
    if tp is None:
        tp = 512 if small_vmem else 1024
    if thw is None:
        thw = 512 if small_vmem else 1024
    vmem_limit = (40 if small_vmem else 64) * 1024 * 1024

    TP = min(int(tp), _round_up(P, 128))
    THW = min(int(thw), _round_up(HW, 128))
    P_pad = _round_up(P, TP)
    HW_pad = _round_up(HW, THW)
    HWT = HW_pad // THW

    # Block TB batches per grid step to amortize the ~0.35us/step overhead on
    # small tiles; TB*tile_elems is bounded so live slabs stay small.
    if tb is None:
        tile_elems = TP * THW
        tb = min(N, 8, max(1, (512 * 512) // tile_elems))
    TB = max(1, min(int(tb), N))
    N_pad = _round_up(N, TB)

    # Keep >= 2 blocks on the parallel grid axes when possible (v7x: 2 TCs/chip).
    if (N_pad // TB) * (P_pad // TP) < 2:
        if TB > 1:
            TB = max(1, TB // 2)
            N_pad = _round_up(N, TB)
        elif P_pad > 128:
            TP = _round_up(P_pad // 2, 128)
            P_pad = _round_up(P, TP)

    C_pad = _round_up(C, 8)                  # sublane-friendly channel count

    # Stream x in bf16 if it arrives that way (halves HBM->VMEM DMA bytes).
    x_dtype = jnp.bfloat16 if x.dtype == jnp.bfloat16 else jnp.float32
    x_flat = x.astype(x_dtype).reshape(N, C, HW)
    x_flat = jnp.pad(x_flat, ((0, N_pad - N), (0, C_pad - C), (0, HW_pad - HW)))
    # (N, HWT, C, THW): HW-tile axis leading so the kernel only needs cheap
    # leading-axis dynamic indexing (no lane-dim dynamic slicing).
    x_tiled = x_flat.reshape(N_pad, C_pad, HWT, THW).swapaxes(1, 2)

    # Keep x resident in VMEM across the P / HW grid axes whenever it fits
    # (double-buffered), removing the per-P-tile HBM re-reads.
    x_block_bytes = TB * HWT * C_pad * THW * x_tiled.dtype.itemsize
    resident_budget = (6 if small_vmem else 16) * 1024 * 1024
    x_resident = 2 * x_block_bytes <= resident_budget
    if x_resident:
        x_spec = pl.BlockSpec((TB, HWT, C_pad, THW),
                              lambda b, p, h: (b, 0, 0, 0))
    else:
        # TODO(synk): very large inputs still re-stream x once per P tile here;
        # a manual-DMA band fetch (memory_space=pl.ANY) would remove that.
        x_spec = pl.BlockSpec((TB, 1, C_pad, THW),
                              lambda b, p, h: (b, h, 0, 0))

    # Flat 1-D theta for SMEM (2-D SMEM arrays pad to [8k, 128] words).
    theta_flat = jnp.pad(theta_rows, ((0, N_pad - N), (0, 0))).reshape(-1)

    # Batch-invariant base grid (align_corners=False): coord = (2*i+1)/size - 1,
    # flattened row-major (x fastest), hoisted out of the kernel.
    xs = (2.0 * jnp.arange(Wout, dtype=jnp.float32) + 1.0) / Wout - 1.0
    ys = (2.0 * jnp.arange(Hout, dtype=jnp.float32) + 1.0) / Hout - 1.0
    base = jnp.stack([jnp.tile(xs, Hout), jnp.repeat(ys, Wout)], axis=0)
    base = jnp.pad(base, ((0, 0), (0, P_pad - P)))

    grid = (N_pad // TB, P_pad // TP, HW_pad // THW)

    kernel = functools.partial(
        _st_affine_kernel, Hin=Hin, Win=Win, HW=HW, THW=THW, TP=TP, TB=TB,
        x_resident=x_resident, use_bf16=use_bf16_matmul)

    x_bytes = x_tiled.size * x_tiled.dtype.itemsize
    cost = pl.CostEstimate(
        flops=int(2 * N_pad * C_pad * HW_pad * P_pad),
        transcendentals=0,
        bytes_accessed=int((x_bytes if x_resident else x_bytes * (P_pad // TP))
                           + N_pad * C_pad * P_pad * 4
                           + base.size * 4 + theta_flat.size * 4))

    out_pad = pl.pallas_call(
        kernel,
        out_shape=jax.ShapeDtypeStruct((N_pad, C_pad, P_pad), jnp.float32),
        grid=grid,
        in_specs=[
            pl.BlockSpec(memory_space=pltpu.MemorySpace.SMEM),       # theta (1-D)
            pl.BlockSpec((2, TP), lambda b, p, h: (0, p)),           # base grid
            x_spec,                                                  # input
        ],
        out_specs=pl.BlockSpec((TB, C_pad, TP), lambda b, p, h: (b, 0, p)),
        compiler_params=pltpu.CompilerParams(
            dimension_semantics=("parallel", "parallel", "arbitrary"),
            vmem_limit_bytes=vmem_limit),
        cost_estimate=cost,
    )(theta_flat, base, x_tiled)

    return out_pad[:N, :C, :P].reshape(N, C, Hout, Wout)


def ref_forward(x, theta, input_shape, inverse=False):
    """Pure-JAX reference (construct_affine + affine_grid + bilinear
    grid_sample, zeros padding, align_corners=False)."""
    theta = theta.astype(jnp.float32)
    if inverse:
        theta = jnp.concatenate([1.0 / theta[:, :2], -theta[:, 2:]], axis=1)
    Hout, Wout = int(input_shape[1]), int(input_shape[2])
    theta_rows = construct_affine(theta).reshape(-1, 6)
    return _affine_grid_sample_ref(x.astype(jnp.float32), theta_rows, Hout, Wout)


if __name__ == "__main__":
    key = jax.random.PRNGKey(0)
    kx, ks, kt = jax.random.split(key, 3)
    N, C, H, W = 2, 4, 16, 16
    input_shape = (C, H, W)

    x = jax.random.normal(kx, (N, C, H, W), dtype=jnp.float32)
    # decomposed params [sx, sy, angle, shear, tx, ty] near identity
    scale = 1.0 + 0.1 * jax.random.normal(ks, (N, 2), dtype=jnp.float32)
    rest = 0.2 * jax.random.normal(kt, (N, 4), dtype=jnp.float32)
    theta = jnp.concatenate([scale, rest], axis=1)

    out = jax.block_until_ready(st_affine_decomp(x, theta, input_shape))
    assert out.shape == (N, C, H, W)

    ref = ref_forward(x, theta, input_shape)
    max_err = float(jnp.max(jnp.abs(out - ref)))
    if not jnp.allclose(out, ref, atol=1e-4, rtol=1e-4):
        raise SystemExit(f"mismatch vs reference, max abs err = {max_err:e}")

    # also exercise the inverse path once
    out_inv = jax.block_until_ready(
        st_affine_decomp(x, theta, input_shape, inverse=True))
    ref_inv = ref_forward(x, theta, input_shape, inverse=True)
    if not jnp.allclose(out_inv, ref_inv, atol=1e-4, rtol=1e-4):
        raise SystemExit("mismatch vs reference (inverse path)")

    print("KERNEL_OK")
</pallas_src>

<mosaic_0001>
module attributes {stable_mosaic.version = 11 : i64} {
  func.func @_st_affine_kernel(%arg0: i32, %arg1: i32, %arg2: i32, %arg3: memref<12xf32, #tpu.memory_space<smem>>, %arg4: memref<2x256xf32, #tpu.memory_space<vmem>>, %arg5: memref<1x1x8x256xf32, #tpu.memory_space<vmem>>, %arg6: memref<1x8x256xf32, #tpu.memory_space<vmem>>) attributes {dimension_semantics = [#tpu.dimension_semantics<parallel>, #tpu.dimension_semantics<parallel>, #tpu.dimension_semantics<arbitrary>], iteration_bounds = array<i64: 2, 1, 1>, scalar_prefetch = 0 : i64, scratch_operands = 0 : i64, tpu.core_type = #tpu.core_type<tc>, window_params = [{transform_indices = @transform_0, window_bounds = array<i64: 12>}, {transform_indices = @transform_1, window_bounds = array<i64: 2, 256>}, {transform_indices = @transform_2, window_bounds = array<i64: 1, 1, 8, 256>}, {transform_indices = @transform_3, window_bounds = array<i64: 1, 8, 256>}]} {
    %c0_i32 = arith.constant 0 : i32
    %0 = arith.cmpi eq, %arg2, %c0_i32 : i32
    %1 = arith.extui %0 : i1 to i32
    %c0_i32_0 = arith.constant 0 : i32
    %2 = arith.cmpi ne, %1, %c0_i32_0 : i32
    scf.if %2 {
      %cst_24 = arith.constant 0.000000e+00 : f32
      %118 = vector.broadcast %cst_24 : f32 to vector<1x8x256xf32>
      %c0_25 = arith.constant 0 : index
      %c0_26 = arith.constant 0 : index
      %c0_27 = arith.constant 0 : index
      %119 = vector.load %arg6[%c0_25, %c0_26, %c0_27] : memref<1x8x256xf32, #tpu.memory_space<vmem>>, vector<1x8x256xf32>
      tpu.vector_store %arg6[%c0_25, %c0_26, %c0_27], %118 {strides = array<i32>} : memref<1x8x256xf32, #tpu.memory_space<vmem>>, vector<1x8x256xf32>,
    } else {
    }
    %c0 = arith.constant 0 : index
    %c0_1 = arith.constant 0 : index
    %3 = vector.load %arg4[%c0, %c0_1] : memref<2x256xf32, #tpu.memory_space<vmem>>, vector<2x256xf32>
    %4 = vector.extract_strided_slice %3 {offsets = [0, 0], sizes = [1, 256], strides = [1, 1]} : vector<2x256xf32> to vector<1x256xf32>
    %5 = vector.extract_strided_slice %3 {offsets = [1, 0], sizes = [1, 256], strides = [1, 1]} : vector<2x256xf32> to vector<1x256xf32>
    %6 = tpu.iota {dimensions = array<i32: 0>} : vector<256x256xi32>
    %c256_i32 = arith.constant 256 : i32
    %7 = arith.muli %arg2, %c256_i32 : i32
    %c0_i32_2 = arith.constant 0 : i32
    %c1_i32 = arith.constant 1 : i32
    %8 = arith.muli %arg0, %c1_i32 : i32
    %9 = arith.addi %8, %c0_i32_2 : i32
    %c6_i32 = arith.constant 6 : i32
    %10 = arith.muli %9, %c6_i32 : i32
    %11 = arith.index_cast %10 : i32 to index
    %12 = memref.load %arg3[%11] : memref<12xf32, #tpu.memory_space<smem>>
    %c1_i32_3 = arith.constant 1 : i32
    %13 = arith.addi %10, %c1_i32_3 : i32
    %14 = arith.index_cast %13 : i32 to index
    %15 = memref.load %arg3[%14] : memref<12xf32, #tpu.memory_space<smem>>
    %c2_i32 = arith.constant 2 : i32
    %16 = arith.addi %10, %c2_i32 : i32
    %17 = arith.index_cast %16 : i32 to index
    %18 = memref.load %arg3[%17] : memref<12xf32, #tpu.memory_space<smem>>
    %c3_i32 = arith.constant 3 : i32
    %19 = arith.addi %10, %c3_i32 : i32
    %20 = arith.index_cast %19 : i32 to index
    %21 = memref.load %arg3[%20] : memref<12xf32, #tpu.memory_space<smem>>
    %c4_i32 = arith.constant 4 : i32
    %22 = arith.addi %10, %c4_i32 : i32
    %23 = arith.index_cast %22 : i32 to index
    %24 = memref.load %arg3[%23] : memref<12xf32, #tpu.memory_space<smem>>
    %c5_i32 = arith.constant 5 : i32
    %25 = arith.addi %10, %c5_i32 : i32
    %26 = arith.index_cast %25 : i32 to index
    %27 = memref.load %arg3[%26] : memref<12xf32, #tpu.memory_space<smem>>
    %28 = vector.broadcast %12 : f32 to vector<1x256xf32>
    %29 = arith.mulf %28, %4 : vector<1x256xf32>
    %30 = vector.broadcast %15 : f32 to vector<1x256xf32>
    %31 = arith.mulf %30, %5 : vector<1x256xf32>
    %32 = arith.addf %29, %31 : vector<1x256xf32>
    %33 = vector.broadcast %18 : f32 to vector<1x256xf32>
    %34 = arith.addf %32, %33 : vector<1x256xf32>
    %35 = vector.broadcast %21 : f32 to vector<1x256xf32>
    %36 = arith.mulf %35, %4 : vector<1x256xf32>
    %37 = vector.broadcast %24 : f32 to vector<1x256xf32>
    %38 = arith.mulf %37, %5 : vector<1x256xf32>
    %39 = arith.addf %36, %38 : vector<1x256xf32>
    %40 = vector.broadcast %27 : f32 to vector<1x256xf32>
    %41 = arith.addf %39, %40 : vector<1x256xf32>
    %cst = arith.constant 8.000000e+00 : f32
    %42 = vector.broadcast %cst : f32 to vector<1x256xf32>
    %43 = arith.mulf %34, %42 : vector<1x256xf32>
    %cst_4 = arith.constant 7.500000e+00 : f32
    %44 = vector.broadcast %cst_4 : f32 to vector<1x256xf32>
    %45 = arith.addf %43, %44 : vector<1x256xf32>
    %cst_5 = arith.constant 8.000000e+00 : f32
    %46 = vector.broadcast %cst_5 : f32 to vector<1x256xf32>
    %47 = arith.mulf %41, %46 : vector<1x256xf32>
    %cst_6 = arith.constant 7.500000e+00 : f32
    %48 = vector.broadcast %cst_6 : f32 to vector<1x256xf32>
    %49 = arith.addf %47, %48 : vector<1x256xf32>
    %50 = math.floor %45 : vector<1x256xf32>
    %51 = math.floor %49 : vector<1x256xf32>
    %52 = arith.fptosi %50 : vector<1x256xf32> to vector<1x256xi32>
    %53 = arith.fptosi %51 : vector<1x256xf32> to vector<1x256xi32>
    %54 = arith.subf %45, %50 : vector<1x256xf32>
    %cst_7 = arith.constant 1.000000e+00 : f32
    %55 = vector.broadcast %cst_7 : f32 to vector<1x256xf32>
    %56 = arith.subf %55, %54 : vector<1x256xf32>
    %57 = arith.subf %49, %51 : vector<1x256xf32>
    %cst_8 = arith.constant 1.000000e+00 : f32
    %58 = vector.broadcast %cst_8 : f32 to vector<1x256xf32>
    %59 = arith.subf %58, %57 : vector<1x256xf32>
    %c0_i32_9 = arith.constant 0 : i32
    %60 = vector.broadcast %c0_i32_9 : i32 to vector<1x256xi32>
    %61 = arith.cmpi sge, %52, %60 : vector<1x256xi32>
    %c16_i32 = arith.constant 16 : i32
    %62 = vector.broadcast %c16_i32 : i32 to vector<1x256xi32>
    %63 = arith.cmpi slt, %52, %62 : vector<1x256xi32>
    %64 = arith.andi %61, %63 : vector<1x256xi1>
    %c-1_i32 = arith.constant -1 : i32
    %65 = vector.broadcast %c-1_i32 : i32 to vector<1x256xi32>
    %66 = arith.cmpi sge, %52, %65 : vector<1x256xi32>
    %c15_i32 = arith.constant 15 : i32
    %67 = vector.broadcast %c15_i32 : i32 to vector<1x256xi32>
    %68 = arith.cmpi slt, %52, %67 : vector<1x256xi32>
    %69 = arith.andi %66, %68 : vector<1x256xi1>
    %c0_i32_10 = arith.constant 0 : i32
    %70 = vector.broadcast %c0_i32_10 : i32 to vector<1x256xi32>
    %71 = arith.cmpi sge, %53, %70 : vector<1x256xi32>
    %c16_i32_11 = arith.constant 16 : i32
    %72 = vector.broadcast %c16_i32_11 : i32 to vector<1x256xi32>
    %73 = arith.cmpi slt, %53, %72 : vector<1x256xi32>
    %74 = arith.andi %71, %73 : vector<1x256xi1>
    %c-1_i32_12 = arith.constant -1 : i32
    %75 = vector.broadcast %c-1_i32_12 : i32 to vector<1x256xi32>
    %76 = arith.cmpi sge, %53, %75 : vector<1x256xi32>
    %c15_i32_13 = arith.constant 15 : i32
    %77 = vector.broadcast %c15_i32_13 : i32 to vector<1x256xi32>
    %78 = arith.cmpi slt, %53, %77 : vector<1x256xi32>
    %79 = arith.andi %76, %78 : vector<1x256xi1>
    %80 = arith.andi %64, %74 : vector<1x256xi1>
    %81 = arith.mulf %56, %59 : vector<1x256xf32>
    %cst_14 = arith.constant 0.000000e+00 : f32
    %82 = vector.broadcast %cst_14 : f32 to vector<1x256xf32>
    %83 = arith.select %80, %81, %82 : vector<1x256xi1>, vector<1x256xf32>
    %84 = arith.andi %69, %74 : vector<1x256xi1>
    %85 = arith.mulf %54, %59 : vector<1x256xf32>
    %cst_15 = arith.constant 0.000000e+00 : f32
    %86 = vector.broadcast %cst_15 : f32 to vector<1x256xf32>
    %87 = arith.select %84, %85, %86 : vector<1x256xi1>, vector<1x256xf32>
    %88 = arith.andi %64, %79 : vector<1x256xi1>
    %89 = arith.mulf %56, %57 : vector<1x256xf32>
    %cst_16 = arith.constant 0.000000e+00 : f32
    %90 = vector.broadcast %cst_16 : f32 to vector<1x256xf32>
    %91 = arith.select %88, %89, %90 : vector<1x256xi1>, vector<1x256xf32>
    %92 = arith.andi %69, %79 : vector<1x256xi1>
    %93 = arith.mulf %54, %57 : vector<1x256xf32>
    %cst_17 = arith.constant 0.000000e+00 : f32
    %94 = vector.broadcast %cst_17 : f32 to vector<1x256xf32>
    %95 = arith.select %92, %93, %94 : vector<1x256xi1>, vector<1x256xf32>
    %c16_i32_18 = arith.constant 16 : i32
    %96 = vector.broadcast %c16_i32_18 : i32 to vector<1x256xi32>
    %97 = arith.muli %53, %96 : vector<1x256xi32>
    %98 = arith.addi %97, %52 : vector<1x256xi32>
    %c-17_i32 = arith.constant -17 : i32
    %c255_i32 = arith.constant 255 : i32
    %99 = vector.broadcast %c-17_i32 : i32 to vector<1x256xi32>
    %100 = arith.maxsi %99, %98 : vector<1x256xi32>
    %101 = vector.broadcast %c255_i32 : i32 to vector<1x256xi32>
    %102 = arith.minsi %101, %100 : vector<1x256xi32>
    %103 = vector.shape_cast %102 : vector<1x256xi32> to vector<1x1x256xi32>
    %cst_19 = arith.constant dense<2147483647> : vector<1xi32>
    %104 = vector.multi_reduction <minsi>, %103, %cst_19 [1, 2] : vector<1x1x256xi32> to vector<1xi32>
    %105 = vector.shape_cast %104 : vector<1xi32> to vector<1x1x1xi32>
    %106 = vector.extract %105[0, 0, 0] : i32 from vector<1x1x1xi32>
    %107 = vector.shape_cast %102 : vector<1x256xi32> to vector<1x1x256xi32>
    %cst_20 = arith.constant dense<-2147483648> : vector<1xi32>
    %108 = vector.multi_reduction <maxsi>, %107, %cst_20 [1, 2] : vector<1x1x256xi32> to vector<1xi32>
    %109 = vector.shape_cast %108 : vector<1xi32> to vector<1x1x1xi32>
    %110 = vector.extract %109[0, 0, 0] : i32 from vector<1x1x1xi32>
    %c17_i32 = arith.constant 17 : i32
    %111 = arith.addi %110, %c17_i32 : i32
    %112 = arith.cmpi sge, %111, %7 : i32
    %c256_i32_21 = arith.constant 256 : i32
    %113 = arith.addi %7, %c256_i32_21 : i32
    %114 = arith.cmpi slt, %106, %113 : i32
    %115 = arith.andi %112, %114 : i1
    %116 = arith.extui %115 : i1 to i32
    %c0_i32_22 = arith.constant 0 : i32
    %117 = arith.cmpi ne, %116, %c0_i32_22 : i32
    scf.if %117 {
      %118 = vector.broadcast %7 : i32 to vector<1x256xi32>
      %119 = arith.subi %98, %118 : vector<1x256xi32>
      %120 = vector.broadcast %119 : vector<1x256xi32> to vector<256x256xi32>
      %121 = arith.subi %6, %120 : vector<256x256xi32>
      %cst_24 = arith.constant 0.000000e+00 : f32
      %122 = vector.broadcast %cst_24 : f32 to vector<1x256xf32>
      %c0_i32_25 = arith.constant 0 : i32
      %123 = vector.broadcast %c0_i32_25 : i32 to vector<256x256xi32>
      %124 = arith.cmpi eq, %121, %123 : vector<256x256xi32>
      %c1_i32_26 = arith.constant 1 : i32
      %125 = vector.broadcast %c1_i32_26 : i32 to vector<256x256xi32>
      %126 = arith.cmpi eq, %121, %125 : vector<256x256xi32>
      %c16_i32_27 = arith.constant 16 : i32
      %127 = vector.broadcast %c16_i32_27 : i32 to vector<256x256xi32>
      %128 = arith.cmpi eq, %121, %127 : vector<256x256xi32>
      %c17_i32_28 = arith.constant 17 : i32
      %129 = vector.broadcast %c17_i32_28 : i32 to vector<256x256xi32>
      %130 = arith.cmpi eq, %121, %129 : vector<256x256xi32>
      %131 = vector.shape_cast %95 : vector<1x256xf32> to vector<1x256xf32>
      %132 = vector.broadcast %131 : vector<1x256xf32> to vector<256x256xf32>
      %133 = vector.shape_cast %122 : vector<1x256xf32> to vector<1x256xf32>
      %134 = vector.broadcast %133 : vector<1x256xf32> to vector<256x256xf32>
      %135 = arith.select %130, %132, %134 : vector<256x256xi1>, vector<256x256xf32>
      %136 = vector.shape_cast %91 : vector<1x256xf32> to vector<1x256xf32>
      %137 = vector.broadcast %136 : vector<1x256xf32> to vector<256x256xf32>
      %138 = arith.select %128, %137, %135 : vector<256x256xi1>, vector<256x256xf32>
      %139 = vector.shape_cast %87 : vector<1x256xf32> to vector<1x256xf32>
      %140 = vector.broadcast %139 : vector<1x256xf32> to vector<256x256xf32>
      %141 = arith.select %126, %140, %138 : vector<256x256xi1>, vector<256x256xf32>
      %142 = vector.shape_cast %83 : vector<1x256xf32> to vector<1x256xf32>
      %143 = vector.broadcast %142 : vector<1x256xf32> to vector<256x256xf32>
      %144 = arith.select %124, %143, %141 : vector<256x256xi1>, vector<256x256xf32>
      %145 = arith.index_cast %c0_i32_2 : i32 to index
      %146 = arith.index_cast %arg2 : i32 to index
      %c0_29 = arith.constant 0 : index
      %c0_30 = arith.constant 0 : index
      %147 = vector.load %arg5[%145, %146, %c0_29, %c0_30] : memref<1x1x8x256xf32, #tpu.memory_space<vmem>>, vector<1x1x8x256xf32>
      %148 = vector.shape_cast %147 : vector<1x1x8x256xf32> to vector<8x256xf32>
      %149 = arith.index_cast %c0_i32_2 : i32 to index
      %c0_31 = arith.constant 0 : index
      %c0_32 = arith.constant 0 : index
      %150 = vector.load %arg6[%149, %c0_31, %c0_32] : memref<1x8x256xf32, #tpu.memory_space<vmem>>, vector<1x8x256xf32>
      %151 = vector.shape_cast %150 : vector<1x8x256xf32> to vector<8x256xf32>
      %cst_33 = arith.constant dense<0.000000e+00> : vector<8x256xf32>
      %152 = tpu.matmul %148, %144, %cst_33 {dimension_numbers = #tpu.dot_dimension_numbers<[1], [0], [0], [1], [0, 0, 1, 1], [], []>} : vector<8x256xf32>, vector<256x256xf32>, vector<8x256xf32> -> vector<8x256xf32>
      %153 = arith.addf %151, %152 : vector<8x256xf32>
      %154 = arith.index_cast %c0_i32_2 : i32 to index
      %c0_34 = arith.constant 0 : index
      %c0_35 = arith.constant 0 : index
      %155 = vector.load %arg6[%154, %c0_34, %c0_35] : memref<1x8x256xf32, #tpu.memory_space<vmem>>, vector<1x8x256xf32>
      %156 = vector.shape_cast %155 : vector<1x8x256xf32> to vector<8x256xf32>
      %157 = vector.shape_cast %153 : vector<8x256xf32> to vector<1x8x256xf32>
      tpu.vector_store %arg6[%154, %c0_34, %c0_35], %157 {strides = array<i32>} : memref<1x8x256xf32, #tpu.memory_space<vmem>>, vector<1x8x256xf32>,
    } else {
    }
    %c1_i32_23 = arith.constant 1 : i32
    return
  }
  func.func @transform_0(%arg0: i32, %arg1: i32, %arg2: i32) -> i32 {
    %c0_i32 = arith.constant 0 : i32
    %c0_i32_0 = arith.constant 0 : i32
    return %c0_i32 : i32
  }
  func.func @transform_1(%arg0: i32, %arg1: i32, %arg2: i32) -> (i32, i32) {
    %c0_i32 = arith.constant 0 : i32
    %c0_i32_0 = arith.constant 0 : i32
    return %c0_i32, %arg1 : i32, i32
  }
  func.func @transform_2(%arg0: i32, %arg1: i32, %arg2: i32) -> (i32, i32, i32, i32) {
    %c0_i32 = arith.constant 0 : i32
    %c0_i32_0 = arith.constant 0 : i32
    %c0_i32_1 = arith.constant 0 : i32
    %c0_i32_2 = arith.constant 0 : i32
    return %arg0, %c0_i32, %c0_i32_0, %c0_i32_1 : i32, i32, i32, i32
  }
  func.func @transform_3(%arg0: i32, %arg1: i32, %arg2: i32) -> (i32, i32, i32) {
    %c0_i32 = arith.constant 0 : i32
    %c0_i32_0 = arith.constant 0 : i32
    return %arg0, %c0_i32, %arg1 : i32, i32, i32
  }
}

</mosaic_0001>

<llo_original>
// kernel: tpu_custom_call.1
$region0: #{tpu_custom_call.1}
  #allocation0 [shape = 'u32[]', space=smem, size = 0x4, offset = 0x4, fixed_abs, tag = 'smem constant byte address 0x4 - core index']
  #allocation1 [shape = 'u32[144,128]{1,0:T(1,128)}', space=vmem, size = 0x12000, scoped, tag = 'internal scratch']
  %s0 = inlined_call_operand.hbm [shape: f32[12], index: 0, kind: input, shape index: {}]
  %s1 = inlined_call_operand.hbm [shape: f32[2,256], index: 1, kind: input, shape index: {}]
  %s2 = inlined_call_operand.hbm [shape: f32[2,1,8,256], index: 2, kind: input, shape index: {}]
  %s3 = inlined_call_operand.hbm [shape: f32[2,8,256], index: 3, kind: output, shape index: {}]
  %s4 = sld [smem:[#allocation0]]
  $region65: #{tpu_custom_call.1} parent=0
    _
  %s6 = ssub.s32 1, %s4
  %s7 = scalar_select 0, %s6, %s4
  $region1: #{tpu_custom_call.1} parent=0
    #allocation2 [shape = 'u8[512]{0}', space=smem, size = 0x200, scoped, tag = 'input window, operand 0, single buffered']
    #allocation3 [shape = 's32[2]{0}', space=sflag, size = 0x8, scoped, tag = 'scoped memory for tpu_custom_call.1']
    #allocation4 [shape = 's32[2]{0}', space=sflag, size = 0x8, scoped, tag = 'scoped memory for tpu_custom_call.1']
    #allocation5 [shape = 's32[2]{0}', space=sflag, size = 0x8, scoped, tag = 'scoped memory for tpu_custom_call.1']
    #allocation6 [shape = 'u8[2048]{0}', space=vmem, size = 0x800, scoped, tag = 'input window, operand 1, single buffered']
    #allocation7 [shape = 'u8[16384]{0}', space=vmem, size = 0x4000, scoped, tag = 'input window, operand 2']
    #allocation8 [shape = 's32[2]{0}', space=sflag, size = 0x8, scoped, tag = 'scoped memory for tpu_custom_call.1']
    #allocation9 [shape = 'u8[16384]{0}', space=vmem, size = 0x4000, scoped, tag = 'output window, operand 0']
    %8 = vsyncpa [#allocation5], 0
    %9 = vsyncpa [#allocation3], 0
    %10 = vsyncpa [#allocation8], 0
    %s11 = scalar_lea.sflag [#allocation8], 1
    %12 = vsyncpa %s11, 0
    %13 = vsyncpa [#allocation4], 0
    %s14 = scalar_lea.sflag [#allocation4], 1
    %15 = vsyncpa %s14, 0
    loop: start=0, step=1, limit=4
    $region2: #{tpu_custom_call.1} parent=1 // loop_pre_header
      _
    $region3: #{tpu_custom_call.1} parent=1 // loop_header
      %s17 = sphi 0, %s21
      %p18 = scmp.ge.s32.totalorder %s17, 4
      %s24 = sphi 0, %s43
      %s25 = sphi 0, %s39
      %s26 = sphi 0, %s35
      %s27 = sphi 0, %s24
      %s28 = sphi 0, %s25
      %s29 = sphi 0, %s26
      %s30 = sphi 0, %s27
      %s31 = sphi 0, %s28
      %s32 = sphi 0, %s29
      %s44 = sphi 0, %s44
      %s46 = sphi 0, %s44
      %s47 = sphi 0, %s46
      %s61 = sphi 0, %s47
      %s67 = sphi 0, %s69
      %s70 = sphi 0, %s67
      %s71 = sphi 0, %s70
      %s87 = sphi 0, %s71
      %s93 = sphi 0, %s95
      %s96 = sphi 0, %s93
      %s97 = sphi 0, %s96
      %s113 = sphi 0, %s97
      %s121 = sphi 0, %s123
      %s124 = sphi 0, %s121
      %s125 = sphi 0, %s124
      %s141 = sphi 0, %s125
    $region4: #{tpu_custom_call.1} parent=1 // loop_header_branch
      %20 = sbr.rel (%p18) target = $region8
    $region5: #{tpu_custom_call.1} parent=1 // loop_body
      %s22 = ssub.s32 %s17, 1
      %s23 = ssub.s32 %s17, 2
      %s33 = sadd.s32 1, %s26
      %p34 = scmp.ge.s32.totalorder %s33, 1
      %s35 = scalar_select %p34, 0, %s33
      %s36 = sadd.s32 1, %s25
      %s37 = scalar_select %p34, %s36, %s25
      %p38 = scmp.ge.s32.totalorder %s37, 1
      %s39 = scalar_select %p38, 0, %s37
      %s40 = sadd.s32 1, %s24
      %s41 = scalar_select %p38, %s40, %s24
      %p42 = scmp.ge.s32.totalorder %s41, 2
      %s43 = scalar_select %p42, 0, %s41
      %s45 = sadd.s32 %s44, 1
      %p48 = scmp.eq.s32.totalorder %s17, 1
      %p49 = scmp.ne.s32.totalorder %s44, %s46
      %p50 = scmp.eq.s32.totalorder %s17, 0
      %p51 = por %p49, %p50
      %p52 = scmp.ne.s32.totalorder %s44, %s46
      %p53 = scmp.eq.s32.totalorder %s22, 1
      %p54 = por %p52, %p53
      %p55 = scmp.ne.s32.totalorder %s46, %s47
      %p56 = scmp.eq.s32.totalorder %s22, 0
      %p57 = por %p55, %p56
      %p58 = scmp.ne.s32.totalorder %s46, %s47
      %p59 = scmp.eq.s32.totalorder %s23, 1
      %p60 = por %p58, %p59
      %p62 = scmp.ne.s32.totalorder %s47, %s61
      %p63 = scmp.eq.s32.totalorder %s23, 0
      %p64 = por %p62, %p63
      %s65 = ssub.s32 %s25, %s39
      %p66 = scmp.eq.s32.totalorder %s65, 0
      %s68 = sadd.s32 %s67, 1
      %s69 = scalar_select %p66, %s67, %s68
      %p72 = pneg %p66
      %p73 = scmp.eq.s32.totalorder %s17, 1
      %p74 = por %p72, %p73
      %p75 = scmp.ne.s32.totalorder %s67, %s70
      %p76 = scmp.eq.s32.totalorder %s17, 0
      %p77 = por %p75, %p76
      %p78 = scmp.ne.s32.totalorder %s67, %s70
      %p79 = scmp.eq.s32.totalorder %s22, 1
      %p80 = por %p78, %p79
      %p81 = scmp.ne.s32.totalorder %s70, %s71
      %p82 = scmp.eq.s32.totalorder %s22, 0
      %p83 = por %p81, %p82
      %p84 = scmp.ne.s32.totalorder %s70, %s71
      %p85 = scmp.eq.s32.totalorder %s23, 1
      %p86 = por %p84, %p85
      %p88 = scmp.ne.s32.totalorder %s71, %s87
      %p89 = scmp.eq.s32.totalorder %s23, 0
      %p90 = por %p88, %p89
      %s91 = ssub.s32 %s24, %s43
      %p92 = scmp.eq.s32.totalorder %s91, 0
      %s94 = sadd.s32 %s93, 1
      %s95 = scalar_select %p92, %s93, %s94
      %p98 = pneg %p92
      %p99 = scmp.eq.s32.totalorder %s17, 1
      %p100 = por %p98, %p99
      %p101 = scmp.ne.s32.totalorder %s93, %s96
      %p102 = scmp.eq.s32.totalorder %s17, 0
      %p103 = por %p101, %p102
      %p104 = scmp.ne.s32.totalorder %s93, %s96
      %p105 = scmp.eq.s32.totalorder %s22, 1
      %p106 = por %p104, %p105
      %p107 = scmp.ne.s32.totalorder %s96, %s97
      %p108 = scmp.eq.s32.totalorder %s22, 0
      %p109 = por %p107, %p108
      %p110 = scmp.ne.s32.totalorder %s96, %s97
      %p111 = scmp.eq.s32.totalorder %s23, 1
      %p112 = por %p110, %p111
      %p114 = scmp.ne.s32.totalorder %s97, %s113
      %p115 = scmp.eq.s32.totalorder %s23, 0
      %p116 = por %p114, %p115
      %s117 = ssub.s32 %s24, %s43
      %s118 = ssub.s32 %s25, %s39
      %s119 = sor.u32 %s117, %s118
      %p120 = scmp.eq.s32.totalorder %s119, 0
      %s122 = sadd.s32 %s121, 1
      %s123 = scalar_select %p120, %s121, %s122
      %p126 = pneg %p120
      %p127 = scmp.eq.s32.totalorder %s17, 1
      %p128 = por %p126, %p127
      %p129 = scmp.ne.s32.totalorder %s121, %s124
      %p130 = scmp.eq.s32.totalorder %s17, 0
      %p131 = por %p129, %p130
      %p132 = scmp.ne.s32.totalorder %s121, %s124
      %p133 = scmp.eq.s32.totalorder %s22, 1
      %p134 = por %p132, %p133
      %p135 = scmp.ne.s32.totalorder %s124, %s125
      %p136 = scmp.eq.s32.totalorder %s22, 0
      %p137 = por %p135, %p136
      %p138 = scmp.ne.s32.totalorder %s124, %s125
      %p139 = scmp.eq.s32.totalorder %s23, 1
      %p140 = por %p138, %p139
      %p142 = scmp.ne.s32.totalorder %s125, %s141
      %p143 = scmp.eq.s32.totalorder %s23, 0
      %p144 = por %p142, %p143
      %p145 = scmp.le.s32.totalorder 1, %s17
      %p146 = scmp.lt.s32.totalorder %s17, 3
      %p147 = pnand %p145, %p146
      %p148 = pneg %p147
      // Predicated region
      $region9: #{tpu_custom_call.1} parent=5 // pred_check
        _
      $region10: #{tpu_custom_call.1} parent=5 // pred_check_branch
        %150 = sbr.rel (%p147) target = $region12
      $region11: #{tpu_custom_call.1} parent=5 // pred_region
        %s151 = ssub.s32 %s17, 1
        // Predicated region
        $region13: #{tpu_custom_call.1} parent=11 // pred_check
          %p152 = pneg %p57
        $region14: #{tpu_custom_call.1} parent=11 // pred_check_branch
          %154 = sbr.rel (%p152) target = $region16
        $region15: #{tpu_custom_call.1} parent=11 // pred_region
          %s156 = ssub.s32 16, 16
          %157 = vsyncadd [#allocation5], %s156
          %160 = dma.hbm_to_smem %s0, 16, [#allocation2], [#allocation5]
        $region16: #{tpu_custom_call.1} parent=11 // pred_fallthru
          _
        // Predicated region
        $region17: #{tpu_custom_call.1} parent=11 // pred_check
          %p161 = pneg %p83
        $region18: #{tpu_custom_call.1} parent=11 // pred_check_branch
          %163 = sbr.rel (%p161) target = $region20
        $region19: #{tpu_custom_call.1} parent=11 // pred_region
          %s164 = smul.u32 2, %s28
          %s166 = ssub.s32 64, 64
          %167 = vsyncadd [#allocation3], %s166
          %s168 = smul.addr %s164, 32
          %s169 = scalar_lea.hbm %s1, %s168
          %s171 = sshll.u32 [#allocation6], 4
          %s172 = int_to_ptr.vmem [resolvable:$true] %s171
          %174 = dma.hbm_to_vmem [thread:$0]  %s169, 64, %s172, [#allocation3]
        $region20: #{tpu_custom_call.1} parent=11 // pred_fallthru
          _
      $region12: #{tpu_custom_call.1} parent=5 // pred_fallthru
        _
      %p175 = scmp.lt.s32.totalorder %s17, 2
      // Predicated region
      $region21: #{tpu_custom_call.1} parent=5 // pred_check
        %p176 = pneg %p175
      $region22: #{tpu_custom_call.1} parent=5 // pred_check_branch
        %178 = sbr.rel (%p176) target = $region24
      $region23: #{tpu_custom_call.1} parent=5 // pred_region
        // Predicated region
        $region25: #{tpu_custom_call.1} parent=23 // pred_check
          %p179 = pneg %p103
        $region26: #{tpu_custom_call.1} parent=23 // pred_check_branch
          %181 = sbr.rel (%p179) target = $region28
        $region27: #{tpu_custom_call.1} parent=23 // pred_region
          %s182 = sand.u32 %s93, 1
          %s183 = scalar_lea.sflag [#allocation8], %s182
          %s184 = sand.u32 %s93, 1
          %s185 = smul.addr %s184, 16
          %s186 = scalar_lea.vmem [#allocation7], %s185
          %s188 = ssub.s32 256, 256
          %189 = vsyncadd %s183, %s188
          %s190 = smul.addr %s24, 2
          %s191 = smul.addr %s190, 128
          %s192 = scalar_lea.hbm %s2, %s191
          %s194 = sshll.u32 %s186, 4
          %s195 = int_to_ptr.vmem [resolvable:$true] %s194
          %197 = dma.hbm_to_vmem [thread:$0]  %s192, 256, %s195, %s183
        $region28: #{tpu_custom_call.1} parent=23 // pred_fallthru
          _
      $region24: #{tpu_custom_call.1} parent=5 // pred_fallthru
        _
      %p198 = scmp.le.s32.totalorder 1, %s17
      %p199 = scmp.lt.s32.totalorder %s17, 3
      %p200 = pnand %p198, %p199
      %p201 = pneg %p200
      // Predicated region
      $region29: #{tpu_custom_call.1} parent=5 // pred_check
        _
      $region30: #{tpu_custom_call.1} parent=5 // pred_check_branch
        %203 = sbr.rel (%p200) target = $region32
      $region31: #{tpu_custom_call.1} parent=5 // pred_region
        %s204 = ssub.s32 %s17, 1
        // Predicated region
        $region33: #{tpu_custom_call.1} parent=31 // pred_check
          %p205 = pneg %p57
        $region34: #{tpu_custom_call.1} parent=31 // pred_check_branch
          %207 = sbr.rel (%p205) target = $region36
        $region35: #{tpu_custom_call.1} parent=31 // pred_region
          %208 = dma.done [#allocation5], 16
        $region36: #{tpu_custom_call.1} parent=31 // pred_fallthru
          _
        // Predicated region
        $region37: #{tpu_custom_call.1} parent=31 // pred_check
          %p209 = pneg %p83
        $region38: #{tpu_custom_call.1} parent=31 // pred_check_branch
          %211 = sbr.rel (%p209) target = $region40
        $region39: #{tpu_custom_call.1} parent=31 // pred_region
          %212 = dma.done [#allocation3], 64
        $region40: #{tpu_custom_call.1} parent=31 // pred_fallthru
          _
        %s213 = sand.u32 %s96, 1
        %s214 = scalar_lea.sflag [#allocation8], %s213
        %s215 = sand.u32 %s96, 1
        %s216 = smul.addr %s215, 16
        %s217 = scalar_lea.vmem [#allocation7], %s216
        // Predicated region
        $region41: #{tpu_custom_call.1} parent=31 // pred_check
          %p218 = pneg %p109
        $region42: #{tpu_custom_call.1} parent=31 // pred_check_branch
          %220 = sbr.rel (%p218) target = $region44
        $region43: #{tpu_custom_call.1} parent=31 // pred_region
          %221 = dma.done %s214, 256
        $region44: #{tpu_custom_call.1} parent=31 // pred_fallthru
          _
        %222 = sfence
        %p223 = pneg %p57
        %p224 = pneg %p54
        %p225 = pneg %p83
        %p226 = pneg %p80
        %s227 = sand.u32 %s96, 1
        %s228 = scalar_lea.sflag [#allocation8], %s227
        %s229 = sand.u32 %s96, 1
        %s230 = smul.addr %s229, 16
        %s231 = scalar_lea.vmem [#allocation7], %s230
        %p232 = pneg %p109
        %p233 = pneg %p106
        %p234 = pneg %p137
        %p235 = pneg %p134
        %s236 = sand.u32 %s124, 1
        %s237 = scalar_lea.sflag [#allocation4], %s236
        %s238 = sand.u32 %s124, 1
        %s239 = smul.addr %s238, 16
        %s240 = scalar_lea.vmem [#allocation9], %s239
        %s241 = smul.u32 2, %s28
        %s242 = smul.u32 2, %s28
        %p243 = scmp.eq.s32.totalorder %s29, 0
        // Predicated region
        $region45: #{tpu_custom_call.1} parent=31 // pred_check
          %p244 = pneg %p243
        $region46: #{tpu_custom_call.1} parent=31 // pred_check_branch
          %246 = sbr.rel (%p244) target = $region48
        $region47: #{tpu_custom_call.1} parent=31 // pred_region
          %247 = vst [vmem:[%s240] sm:$0xff] 0.0
          %248 = vst [vmem:[%s240 + $0x8] sm:$0xff] 0.0
        $region48: #{tpu_custom_call.1} parent=31 // pred_fallthru
          _
        %v249 = vld [vmem:[#allocation6] sm:$0xf]
        %v250 = vlaneseq
        %v251 = vshrl.u32 %v250, 7
        %v252 = vadd.s32 %v251, 8
        %v253 = vadd.s32 %v251, 16
        %v254 = vadd.s32 %v251, 24
        %v255 = vadd.s32 %v251, 32
        %v256 = vadd.s32 %v251, 40
        %v257 = vadd.s32 %v251, 48
        %v258 = vadd.s32 %v251, 56
        %v259 = vadd.s32 %v251, 64
        %v260 = vadd.s32 %v251, 72
        %v261 = vadd.s32 %v251, 80
        %v262 = vadd.s32 %v251, 88
        %v263 = vadd.s32 %v251, 96
        %v264 = vadd.s32 %v251, 104
        %v265 = vadd.s32 %v251, 112
        %v266 = vadd.s32 %v251, 120
        %v267 = vadd.s32 %v251, 128
        %v268 = vadd.s32 %v251, 136
        %v269 = vadd.s32 %v251, 144
        %v270 = vadd.s32 %v251, 152
        %v271 = vadd.s32 %v251, 160
        %v272 = vadd.s32 %v251, 168
        %v273 = vadd.s32 %v251, 176
        %v274 = vadd.s32 %v251, 184
        %v275 = vadd.s32 %v251, 192
        %v276 = vadd.s32 %v251, 200
        %v277 = vadd.s32 %v251, 208
        %v278 = vadd.s32 %v251, 216
        %v279 = vadd.s32 %v251, 224
        %v280 = vadd.s32 %v251, 232
        %v281 = vadd.s32 %v251, 240
        %v282 = vadd.s32 %v251, 248
        %s283 = smul.u32 %s29, 256
        %s284 = smul.u32 %s27, 6
        %s285 = sld [smem:[#allocation2 + %s284]]
        %s286 = sadd.s32 %s284, 1
        %s287 = sld [smem:[#allocation2 + %s286]]
        %s288 = sadd.s32 %s284, 2
        %s289 = sld [smem:[#allocation2 + %s288]]
        %s290 = sadd.s32 %s284, 3
        %s291 = sld [smem:[#allocation2 + %s290]]
        %s292 = sadd.s32 %s284, 4
        %s293 = sld [smem:[#allocation2 + %s292]]
        %s294 = sadd.s32 %s284, 5
        %s295 = sld [smem:[#allocation2 + %s294]]
        %v296 = vstv %s285
        %v297 = vmul.f32 %v296, %v249
        %v298 = vstv %s287
        %v299 = vmul.f32 %v298, %v249
        %v301 = vrot.slane %v299, 7
        %v302 = vrot.slane %v301, 2
        %v304 = vadd.f32 %v297, %v302
        %v305 = vstv %s289
        %v306 = vadd.f32 %v304, %v305
        %v307 = vstv %s291
        %v308 = vmul.f32 %v307, %v249
        %v309 = vstv %s293
        %v310 = vmul.f32 %v309, %v249
        %v312 = vrot.slane %v310, 7
        %v313 = vrot.slane %v312, 2
        %v315 = vadd.f32 %v308, %v313
        %v316 = vstv %s295
        %v317 = vadd.f32 %v315, %v316
        %v318 = vmul.f32 %v306, 8.0
        %v319 = vadd.f32 %v318, 7.5
        %v320 = vmul.f32 %v317, 8.0
        %v321 = vadd.f32 %v320, 7.5
        %v322 = vfloor.f32 %v319
        %v323 = vfloor.f32 %v321
        %v324 = vcvt.f32.s32.to.zero.pseudo %v322
        %v325 = vcvt.f32.s32.to.zero.pseudo %v323
        %v326 = vsub.f32 %v319, %v322
        %v327 = vsub.f32 1.0, %v326
        %v328 = vsub.f32 %v321, %v323
        %v329 = vsub.f32 1.0, %v328
        %vm330 = vcmp.ge.s32.totalorder %v324, 0
        %vm331 = vcmp.lt.s32.totalorder %v324, 16
        %vm332 = vmand %vm330, %vm331
        %vm333 = vcmp.ge.s32.totalorder %v324, 4294967295
        %vm334 = vcmp.lt.s32.totalorder %v324, 15
        %vm335 = vmand %vm333, %vm334
        %vm336 = vcmp.ge.s32.totalorder %v325, 0
        %vm337 = vcmp.lt.s32.totalorder %v325, 16
        %vm338 = vmand %vm336, %vm337
        %vm339 = vcmp.ge.s32.totalorder %v325, 4294967295
        %vm340 = vcmp.lt.s32.totalorder %v325, 15
        %vm341 = vmand %vm339, %vm340
        %vm342 = vmand %vm332, %vm338
        %v343 = vmul.f32 %v327, %v329
        %v344 = vsel %vm342, %v343, 0.0
        %vm345 = vmand %vm335, %vm338
        %v346 = vmul.f32 %v326, %v329
        %v347 = vsel %vm345, %v346, 0.0
        %vm348 = vmand %vm332, %vm341
        %v349 = vmul.f32 %v327, %v328
        %v350 = vsel %vm348, %v349, 0.0
        %vm351 = vmand %vm335, %vm341
        %v352 = vmul.f32 %v326, %v328
        %v353 = vsel %vm351, %v352, 0.0
        %v354 = vmul.u32 %v325, 16
        %v355 = vadd.s32 %v354, %v324
        %vm356 = vcmp.gt.s32.totalorder %v355, 4294967279
        %v357 = vsel %vm356, %v355, 4294967279
        %vm358 = vcmp.lt.s32.totalorder %v357, 255
        %v359 = vsel %vm358, %v357, 255
        %v360 = vlaneseq
        %v361 = vshrl.u32 %v360, 7
        %v362 = vsub.s32 0, %v361
        %v363 = vrot.slane %v359, %v362
        %v364 = vlaneseq
        %v365 = vshrl.u32 %v364, 7
        %v366 = vsub.s32 2, %v365
        %v367 = vrot.slane %v359, %v366
        %vm368 = vcmask 1040384
        %v369 = vsel %vm368, %v363, 2147483647
        %v370 = vsel %vm368, %v367, 2147483647
        %vm371 = vcmp.lt.s32.totalorder %v369, %v370
        %v372 = vsel %vm371, %v369, %v370
        %v373 = vand.u32 %v372, 65535
        %v374 = vshra.s32 %v372, 16
        %v375 = vcvt.s32.f32 %v373
        %v376 = vcvt.s32.f32 %v374
        %377 = vmin.xlane.f32.xlu0 %v376
        %v378 = vpop.xlane.xlu0 %377
        %vm379 = vcmp.eq.f32.partialorder %v376, %v378
        %v380 = vsel %vm379, %v375, inf
        %381 = vmin.xlane.f32.xlu0 %v380
        %v382 = vpop.xlane.xlu0 %381
        %v383 = vcvt.f32.s32 %v382
        %v384 = vcvt.f32.s32 %v378
        %v385 = vshll.u32 %v384, 16
        %v386 = vadd.s32 %v385, %v383
        %v387 = vrot.slane %v386, 4
        %vm388 = vcmp.lt.s32.totalorder %v386, %v387
        %v389 = vsel %vm388, %v386, %v387
        %v390 = vrot.slane %v389, 2
        %vm391 = vcmp.lt.s32.totalorder %v389, %v390
        %v392 = vsel %vm391, %v389, %v390
        %v393 = vrot.slane %v392, 1
        %vm394 = vcmp.lt.s32.totalorder %v392, %v393
        %v395 = vsel %vm394, %v392, %v393
        %s396 = vtos %v395
        %v397 = vsel %vm368, %v363, 2147483648
        %v398 = vsel %vm368, %v367, 2147483648
        %vm399 = vcmp.gt.s32.totalorder %v397, %v398
        %v400 = vsel %vm399, %v397, %v398
        %v401 = vand.u32 %v400, 65535
        %v402 = vshra.s32 %v400, 16
        %v403 = vcvt.s32.f32 %v401
        %v404 = vcvt.s32.f32 %v402
        %405 = vmax.xlane.f32.xlu0 %v404
        %v406 = vpop.xlane.xlu0 %405
        %vm407 = vcmp.eq.f32.partialorder %v404, %v406
        %v408 = vsel %vm407, %v403, -inf
        %409 = vmax.xlane.f32.xlu0 %v408
        %v410 = vpop.xlane.xlu0 %409
        %v411 = vcvt.f32.s32 %v410
        %v412 = vcvt.f32.s32 %v406
        %v413 = vshll.u32 %v412, 16
        %v414 = vadd.s32 %v413, %v411
        %v415 = vrot.slane %v414, 4
        %vm416 = vcmp.gt.s32.totalorder %v414, %v415
        %v417 = vsel %vm416, %v414, %v415
        %v418 = vrot.slane %v417, 2
        %vm419 = vcmp.gt.s32.totalorder %v417, %v418
        %v420 = vsel %vm419, %v417, %v418
        %v421 = vrot.slane %v420, 1
        %vm422 = vcmp.gt.s32.totalorder %v420, %v421
        %v423 = vsel %vm422, %v420, %v421
        %s424 = vtos %v423
        %s425 = sadd.s32 %s424, 17
        %p426 = scmp.ge.s32.totalorder %s425, %s283
        %s427 = sadd.s32 %s283, 256
        %p428 = scmp.lt.s32.totalorder %s396, %s427
        %p429 = pnand %p426, %p428
        %p430 = pneg %p429
        // Predicated region
        $region49: #{tpu_custom_call.1} parent=31 // pred_check
          _
        $region50: #{tpu_custom_call.1} parent=31 // pred_check_branch
          %432 = sbr.rel (%p429) target = $region52
        $region51: #{tpu_custom_call.1} parent=31 // pred_region
          %v433 = vstv %s283
          %v434 = vsub.s32 %v355, %v433
          %v435 = vlaneseq
          %v436 = vshrl.u32 %v435, 7
          %v437 = vsub.s32 0, %v436
          %v438 = vrot.slane %v434, %v437
          %v439 = vlaneseq
          %v440 = vshrl.u32 %v439, 7
          %v441 = vsub.s32 2, %v440
          %v442 = vrot.slane %v434, %v441
          %v443 = vlaneseq
          %v444 = vshrl.u32 %v443, 7
          %v445 = vsub.s32 0, %v444
          %v446 = vrot.slane %v438, %v445
          %v447 = vlaneseq
          %v448 = vshrl.u32 %v447, 7
          %v449 = vsub.s32 0, %v448
          %v450 = vrot.slane %v442, %v449
          %v451 = vsub.s32 %v251, %v446
          %v452 = vsub.s32 %v251, %v450
          %v453 = vsub.s32 %v252, %v446
          %v454 = vsub.s32 %v252, %v450
          %v455 = vsub.s32 %v253, %v446
          %v456 = vsub.s32 %v253, %v450
          %v457 = vsub.s32 %v254, %v446
          %v458 = vsub.s32 %v254, %v450
          %v459 = vsub.s32 %v255, %v446
          %v460 = vsub.s32 %v255, %v450
          %v461 = vsub.s32 %v256, %v446
          %v462 = vsub.s32 %v256, %v450
          %v463 = vsub.s32 %v257, %v446
          %v464 = vsub.s32 %v257, %v450
          %v465 = vsub.s32 %v258, %v446
          %v466 = vsub.s32 %v258, %v450
          %v467 = vsub.s32 %v259, %v446
          %v468 = vsub.s32 %v259, %v450
          %v469 = vsub.s32 %v260, %v446
          %v470 = vsub.s32 %v260, %v450
          %v471 = vsub.s32 %v261, %v446
          %v472 = vsub.s32 %v261, %v450
          %v473 = vsub.s32 %v262, %v446
          %v474 = vsub.s32 %v262, %v450
          %v475 = vsub.s32 %v263, %v446
          %v476 = vsub.s32 %v263, %v450
          %v477 = vsub.s32 %v264, %v446
          %v478 = vsub.s32 %v264, %v450
          %v479 = vsub.s32 %v265, %v446
          %v480 = vsub.s32 %v265, %v450
          %v481 = vsub.s32 %v266, %v446
          %v482 = vsub.s32 %v266, %v450
          %v483 = vsub.s32 %v267, %v446
          %v484 = vsub.s32 %v267, %v450
          %v485 = vsub.s32 %v268, %v446
          %v486 = vsub.s32 %v268, %v450
          %v487 = vsub.s32 %v269, %v446
          %v488 = vsub.s32 %v269, %v450
          %v489 = vsub.s32 %v270, %v446
          %v490 = vsub.s32 %v270, %v450
          %v491 = vsub.s32 %v271, %v446
          %v492 = vsub.s32 %v271, %v450
          %v493 = vsub.s32 %v272, %v446
          %v494 = vsub.s32 %v272, %v450
          %v495 = vsub.s32 %v273, %v446
          %v496 = vsub.s32 %v273, %v450
          %v497 = vsub.s32 %v274, %v446
          %v498 = vsub.s32 %v274, %v450
          %v499 = vsub.s32 %v275, %v446
          %v500 = vsub.s32 %v275, %v450
          %v501 = vsub.s32 %v276, %v446
          %v502 = vsub.s32 %v276, %v450
          %v503 = vsub.s32 %v277, %v446
          %v504 = vsub.s32 %v277, %v450
          %v505 = vsub.s32 %v278, %v446
          %v506 = vsub.s32 %v278, %v450
          %v507 = vsub.s32 %v279, %v446
          %v508 = vsub.s32 %v279, %v450
          %v509 = vsub.s32 %v280, %v446
          %v510 = vsub.s32 %v280, %v450
          %v511 = vsub.s32 %v281, %v446
          %v512 = vsub.s32 %v281, %v450
          %v513 = vsub.s32 %v282, %v446
          %v514 = vsub.s32 %v282, %v450
          %vm515 = vcmp.eq.s32.totalorder %v451, 0
          %vm516 = vcmp.eq.s32.totalorder %v452, 0
          %vm517 = vcmp.eq.s32.totalorder %v453, 0
          %vm518 = vcmp.eq.s32.totalorder %v454, 0
          %vm519 = vcmp.eq.s32.totalorder %v455, 0
          %vm520 = vcmp.eq.s32.totalorder %v456, 0
          %vm521 = vcmp.eq.s32.totalorder %v457, 0
          %vm522 = vcmp.eq.s32.totalorder %v458, 0
          %vm523 = vcmp.eq.s32.totalorder %v459, 0
          %vm524 = vcmp.eq.s32.totalorder %v460, 0
          %vm525 = vcmp.eq.s32.totalorder %v461, 0
          %vm526 = vcmp.eq.s32.totalorder %v462, 0
          %vm527 = vcmp.eq.s32.totalorder %v463, 0
          %vm528 = vcmp.eq.s32.totalorder %v464, 0
          %vm529 = vcmp.eq.s32.totalorder %v465, 0
          %vm530 = vcmp.eq.s32.totalorder %v466, 0
          %vm531 = vcmp.eq.s32.totalorder %v467, 0
          %vm532 = vcmp.eq.s32.totalorder %v468, 0
          %vm533 = vcmp.eq.s32.totalorder %v469, 0
          %vm534 = vcmp.eq.s32.totalorder %v470, 0
          %vm535 = vcmp.eq.s32.totalorder %v471, 0
          %vm536 = vcmp.eq.s32.totalorder %v472, 0
          %vm537 = vcmp.eq.s32.totalorder %v473, 0
          %vm538 = vcmp.eq.s32.totalorder %v474, 0
          %vm539 = vcmp.eq.s32.totalorder %v475, 0
          %vm540 = vcmp.eq.s32.totalorder %v476, 0
          %vm541 = vcmp.eq.s32.totalorder %v477, 0
          %vm542 = vcmp.eq.s32.totalorder %v478, 0
          %vm543 = vcmp.eq.s32.totalorder %v479, 0
          %vm544 = vcmp.eq.s32.totalorder %v480, 0
          %vm545 = vcmp.eq.s32.totalorder %v481, 0
          %vm546 = vcmp.eq.s32.totalorder %v482, 0
          %vm547 = vcmp.eq.s32.totalorder %v483, 0
          %vm548 = vcmp.eq.s32.totalorder %v484, 0
          %vm549 = vcmp.eq.s32.totalorder %v485, 0
          %vm550 = vcmp.eq.s32.totalorder %v486, 0
          %vm551 = vcmp.eq.s32.totalorder %v487, 0
          %vm552 = vcmp.eq.s32.totalorder %v488, 0
          %vm553 = vcmp.eq.s32.totalorder %v489, 0
          %vm554 = vcmp.eq.s32.totalorder %v490, 0
          %vm555 = vcmp.eq.s32.totalorder %v491, 0
          %vm556 = vcmp.eq.s32.totalorder %v492, 0
          %vm557 = vcmp.eq.s32.totalorder %v493, 0
          %vm558 = vcmp.eq.s32.totalorder %v494, 0
          %vm559 = vcmp.eq.s32.totalorder %v495, 0
          %vm560 = vcmp.eq.s32.totalorder %v496, 0
          %vm561 = vcmp.eq.s32.totalorder %v497, 0
          %vm562 = vcmp.eq.s32.totalorder %v498, 0
          %vm563 = vcmp.eq.s32.totalorder %v499, 0
          %vm564 = vcmp.eq.s32.totalorder %v500, 0
          %vm565 = vcmp.eq.s32.totalorder %v501, 0
          %vm566 = vcmp.eq.s32.totalorder %v502, 0
          %vm567 = vcmp.eq.s32.totalorder %v503, 0
          %vm568 = vcmp.eq.s32.totalorder %v504, 0
          %vm569 = vcmp.eq.s32.totalorder %v505, 0
          %vm570 = vcmp.eq.s32.totalorder %v506, 0
          %vm571 = vcmp.eq.s32.totalorder %v507, 0
          %vm572 = vcmp.eq.s32.totalorder %v508, 0
          %vm573 = vcmp.eq.s32.totalorder %v509, 0
          %vm574 = vcmp.eq.s32.totalorder %v510, 0
          %vm575 = vcmp.eq.s32.totalorder %v511, 0
          %vm576 = vcmp.eq.s32.totalorder %v512, 0
          %vm577 = vcmp.eq.s32.totalorder %v513, 0
          %vm578 = vcmp.eq.s32.totalorder %v514, 0
          %vm579 = vcmp.eq.s32.totalorder %v451, 1
          %vm580 = vcmp.eq.s32.totalorder %v452, 1
          %vm581 = vcmp.eq.s32.totalorder %v453, 1
          %vm582 = vcmp.eq.s32.totalorder %v454, 1
          %vm583 = vcmp.eq.s32.totalorder %v455, 1
          %vm584 = vcmp.eq.s32.totalorder %v456, 1
          %vm585 = vcmp.eq.s32.totalorder %v457, 1
          %vm586 = vcmp.eq.s32.totalorder %v458, 1
          %vm587 = vcmp.eq.s32.totalorder %v459, 1
          %vm588 = vcmp.eq.s32.totalorder %v460, 1
          %vm589 = vcmp.eq.s32.totalorder %v461, 1
          %vm590 = vcmp.eq.s32.totalorder %v462, 1
          %vm591 = vcmp.eq.s32.totalorder %v463, 1
          %vm592 = vcmp.eq.s32.totalorder %v464, 1
          %vm593 = vcmp.eq.s32.totalorder %v465, 1
          %vm594 = vcmp.eq.s32.totalorder %v466, 1
          %vm595 = vcmp.eq.s32.totalorder %v467, 1
          %vm596 = vcmp.eq.s32.totalorder %v468, 1
          %vm597 = vcmp.eq.s32.totalorder %v469, 1
          %vm598 = vcmp.eq.s32.totalorder %v470, 1
          %vm599 = vcmp.eq.s32.totalorder %v471, 1
          %vm600 = vcmp.eq.s32.totalorder %v472, 1
          %vm601 = vcmp.eq.s32.totalorder %v473, 1
          %vm602 = vcmp.eq.s32.totalorder %v474, 1
          %vm603 = vcmp.eq.s32.totalorder %v475, 1
          %vm604 = vcmp.eq.s32.totalorder %v476, 1
          %vm605 = vcmp.eq.s32.totalorder %v477, 1
          %vm606 = vcmp.eq.s32.totalorder %v478, 1
          %vm607 = vcmp.eq.s32.totalorder %v479, 1
          %vm608 = vcmp.eq.s32.totalorder %v480, 1
          %vm609 = vcmp.eq.s32.totalorder %v481, 1
          %vm610 = vcmp.eq.s32.totalorder %v482, 1
          %vm611 = vcmp.eq.s32.totalorder %v483, 1
          %vm612 = vcmp.eq.s32.totalorder %v484, 1
          %vm613 = vcmp.eq.s32.totalorder %v485, 1
          %vm614 = vcmp.eq.s32.totalorder %v486, 1
          %vm615 = vcmp.eq.s32.totalorder %v487, 1
          %vm616 = vcmp.eq.s32.totalorder %v488, 1
          %vm617 = vcmp.eq.s32.totalorder %v489, 1
          %vm618 = vcmp.eq.s32.totalorder %v490, 1
          %vm619 = vcmp.eq.s32.totalorder %v491, 1
          %vm620 = vcmp.eq.s32.totalorder %v492, 1
          %vm621 = vcmp.eq.s32.totalorder %v493, 1
          %vm622 = vcmp.eq.s32.totalorder %v494, 1
          %vm623 = vcmp.eq.s32.totalorder %v495, 1
          %vm624 = vcmp.eq.s32.totalorder %v496, 1
          %vm625 = vcmp.eq.s32.totalorder %v497, 1
          %vm626 = vcmp.eq.s32.totalorder %v498, 1
          %vm627 = vcmp.eq.s32.totalorder %v499, 1
          %vm628 = vcmp.eq.s32.totalorder %v500, 1
          %vm629 = vcmp.eq.s32.totalorder %v501, 1
          %vm630 = vcmp.eq.s32.totalorder %v502, 1
          %vm631 = vcmp.eq.s32.totalorder %v503, 1
          %vm632 = vcmp.eq.s32.totalorder %v504, 1
          %vm633 = vcmp.eq.s32.totalorder %v505, 1
          %vm634 = vcmp.eq.s32.totalorder %v506, 1
          %vm635 = vcmp.eq.s32.totalorder %v507, 1
          %vm636 = vcmp.eq.s32.totalorder %v508, 1
          %vm637 = vcmp.eq.s32.totalorder %v509, 1
          %vm638 = vcmp.eq.s32.totalorder %v510, 1
          %vm639 = vcmp.eq.s32.totalorder %v511, 1
          %vm640 = vcmp.eq.s32.totalorder %v512, 1
          %vm641 = vcmp.eq.s32.totalorder %v513, 1
          %vm642 = vcmp.eq.s32.totalorder %v514, 1
          %vm643 = vcmp.eq.s32.totalorder %v451, 16
          %vm644 = vcmp.eq.s32.totalorder %v452, 16
          %vm645 = vcmp.eq.s32.totalorder %v453, 16
          %vm646 = vcmp.eq.s32.totalorder %v454, 16
          %vm647 = vcmp.eq.s32.totalorder %v455, 16
          %vm648 = vcmp.eq.s32.totalorder %v456, 16
          %vm649 = vcmp.eq.s32.totalorder %v457, 16
          %vm650 = vcmp.eq.s32.totalorder %v458, 16
          %vm651 = vcmp.eq.s32.totalorder %v459, 16
          %vm652 = vcmp.eq.s32.totalorder %v460, 16
          %vm653 = vcmp.eq.s32.totalorder %v461, 16
          %vm654 = vcmp.eq.s32.totalorder %v462, 16
          %vm655 = vcmp.eq.s32.totalorder %v463, 16
          %vm656 = vcmp.eq.s32.totalorder %v464, 16
          %vm657 = vcmp.eq.s32.totalorder %v465, 16
          %vm658 = vcmp.eq.s32.totalorder %v466, 16
          %vm659 = vcmp.eq.s32.totalorder %v467, 16
          %vm660 = vcmp.eq.s32.totalorder %v468, 16
          %vm661 = vcmp.eq.s32.totalorder %v469, 16
          %vm662 = vcmp.eq.s32.totalorder %v470, 16
          %vm663 = vcmp.eq.s32.totalorder %v471, 16
          %vm664 = vcmp.eq.s32.totalorder %v472, 16
          %vm665 = vcmp.eq.s32.totalorder %v473, 16
          %vm666 = vcmp.eq.s32.totalorder %v474, 16
          %vm667 = vcmp.eq.s32.totalorder %v475, 16
          %vm668 = vcmp.eq.s32.totalorder %v476, 16
          %vm669 = vcmp.eq.s32.totalorder %v477, 16
          %vm670 = vcmp.eq.s32.totalorder %v478, 16
          %vm671 = vcmp.eq.s32.totalorder %v479, 16
          %vm672 = vcmp.eq.s32.totalorder %v480, 16
          %vm673 = vcmp.eq.s32.totalorder %v481, 16
          %vm674 = vcmp.eq.s32.totalorder %v482, 16
          %vm675 = vcmp.eq.s32.totalorder %v483, 16
          %vm676 = vcmp.eq.s32.totalorder %v484, 16
          %vm677 = vcmp.eq.s32.totalorder %v485, 16
          %vm678 = vcmp.eq.s32.totalorder %v486, 16
          %vm679 = vcmp.eq.s32.totalorder %v487, 16
          %vm680 = vcmp.eq.s32.totalorder %v488, 16
          %vm681 = vcmp.eq.s32.totalorder %v489, 16
          %vm682 = vcmp.eq.s32.totalorder %v490, 16
          %vm683 = vcmp.eq.s32.totalorder %v491, 16
          %vm684 = vcmp.eq.s32.totalorder %v492, 16
          %vm685 = vcmp.eq.s32.totalorder %v493, 16
          %vm686 = vcmp.eq.s32.totalorder %v494, 16
          %vm687 = vcmp.eq.s32.totalorder %v495, 16
          %vm688 = vcmp.eq.s32.totalorder %v496, 16
          %vm689 = vcmp.eq.s32.totalorder %v497, 16
          %vm690 = vcmp.eq.s32.totalorder %v498, 16
          %vm691 = vcmp.eq.s32.totalorder %v499, 16
          %vm692 = vcmp.eq.s32.totalorder %v500, 16
          %vm693 = vcmp.eq.s32.totalorder %v501, 16
          %vm694 = vcmp.eq.s32.totalorder %v502, 16
          %vm695 = vcmp.eq.s32.totalorder %v503, 16
          %vm696 = vcmp.eq.s32.totalorder %v504, 16
          %vm697 = vcmp.eq.s32.totalorder %v505, 16
          %vm698 = vcmp.eq.s32.totalorder %v506, 16
          %vm699 = vcmp.eq.s32.totalorder %v507, 16
          %vm700 = vcmp.eq.s32.totalorder %v508, 16
          %vm701 = vcmp.eq.s32.totalorder %v509, 16
          %vm702 = vcmp.eq.s32.totalorder %v510, 16
          %vm703 = vcmp.eq.s32.totalorder %v511, 16
          %vm704 = vcmp.eq.s32.totalorder %v512, 16
          %vm705 = vcmp.eq.s32.totalorder %v513, 16
          %vm706 = vcmp.eq.s32.totalorder %v514, 16
          %vm707 = vcmp.eq.s32.totalorder %v451, 17
          %vm708 = vcmp.eq.s32.totalorder %v452, 17
          %vm709 = vcmp.eq.s32.totalorder %v453, 17
          %vm710 = vcmp.eq.s32.totalorder %v454, 17
          %vm711 = vcmp.eq.s32.totalorder %v455, 17
          %vm712 = vcmp.eq.s32.totalorder %v456, 17
          %vm713 = vcmp.eq.s32.totalorder %v457, 17
          %vm714 = vcmp.eq.s32.totalorder %v458, 17
          %vm715 = vcmp.eq.s32.totalorder %v459, 17
          %vm716 = vcmp.eq.s32.totalorder %v460, 17
          %vm717 = vcmp.eq.s32.totalorder %v461, 17
          %vm718 = vcmp.eq.s32.totalorder %v462, 17
          %vm719 = vcmp.eq.s32.totalorder %v463, 17
          %vm720 = vcmp.eq.s32.totalorder %v464, 17
          %vm721 = vcmp.eq.s32.totalorder %v465, 17
          %vm722 = vcmp.eq.s32.totalorder %v466, 17
          %vm723 = vcmp.eq.s32.totalorder %v467, 17
          %vm724 = vcmp.eq.s32.totalorder %v468, 17
          %vm725 = vcmp.eq.s32.totalorder %v469, 17
          %vm726 = vcmp.eq.s32.totalorder %v470, 17
          %vm727 = vcmp.eq.s32.totalorder %v471, 17
          %vm728 = vcmp.eq.s32.totalorder %v472, 17
          %vm729 = vcmp.eq.s32.totalorder %v473, 17
          %vm730 = vcmp.eq.s32.totalorder %v474, 17
          %vm731 = vcmp.eq.s32.totalorder %v475, 17
          %vm732 = vcmp.eq.s32.totalorder %v476, 17
          %vm733 = vcmp.eq.s32.totalorder %v477, 17
          %vm734 = vcmp.eq.s32.totalorder %v478, 17
          %vm735 = vcmp.eq.s32.totalorder %v479, 17
          %vm736 = vcmp.eq.s32.totalorder %v480, 17
          %vm737 = vcmp.eq.s32.totalorder %v481, 17
          %vm738 = vcmp.eq.s32.totalorder %v482, 17
          %vm739 = vcmp.eq.s32.totalorder %v483, 17
          %vm740 = vcmp.eq.s32.totalorder %v484, 17
          %vm741 = vcmp.eq.s32.totalorder %v485, 17
          %vm742 = vcmp.eq.s32.totalorder %v486, 17
          %vm743 = vcmp.eq.s32.totalorder %v487, 17
          %vm744 = vcmp.eq.s32.totalorder %v488, 17
          %vm745 = vcmp.eq.s32.totalorder %v489, 17
          %vm746 = vcmp.eq.s32.totalorder %v490, 17
          %vm747 = vcmp.eq.s32.totalorder %v491, 17
          %vm748 = vcmp.eq.s32.totalorder %v492, 17
          %vm749 = vcmp.eq.s32.totalorder %v493, 17
          %vm750 = vcmp.eq.s32.totalorder %v494, 17
          %vm751 = vcmp.eq.s32.totalorder %v495, 17
          %vm752 = vcmp.eq.s32.totalorder %v496, 17
          %vm753 = vcmp.eq.s32.totalorder %v497, 17
          %vm754 = vcmp.eq.s32.totalorder %v498, 17
          %vm755 = vcmp.eq.s32.totalorder %v499, 17
          %vm756 = vcmp.eq.s32.totalorder %v500, 17
          %vm757 = vcmp.eq.s32.totalorder %v501, 17
          %vm758 = vcmp.eq.s32.totalorder %v502, 17
          %vm759 = vcmp.eq.s32.totalorder %v503, 17
          %vm760 = vcmp.eq.s32.totalorder %v504, 17
          %vm761 = vcmp.eq.s32.totalorder %v505, 17
          %vm762 = vcmp.eq.s32.totalorder %v506, 17
          %vm763 = vcmp.eq.s32.totalorder %v507, 17
          %vm764 = vcmp.eq.s32.totalorder %v508, 17
          %vm765 = vcmp.eq.s32.totalorder %v509, 17
          %vm766 = vcmp.eq.s32.totalorder %v510, 17
          %vm767 = vcmp.eq.s32.totalorder %v511, 17
          %vm768 = vcmp.eq.s32.totalorder %v512, 17
          %vm769 = vcmp.eq.s32.totalorder %v513, 17
          %vm770 = vcmp.eq.s32.totalorder %v514, 17
          %v772 = vlaneseq
          %v773 = vshrl.u32 %v772, 7
          %v774 = vsub.s32 0, %v773
          %v775 = vrot.slane %v353, %v774
          %v776 = vlaneseq
          %v777 = vshrl.u32 %v776, 7
          %v778 = vsub.s32 2, %v777
          %v779 = vrot.slane %v353, %v778
          %v782 = vlaneseq
          %v783 = vshrl.u32 %v782, 7
          %v784 = vsub.s32 0, %v783
          %v785 = vrot.slane %v775, %v784
          %v786 = vlaneseq
          %v787 = vshrl.u32 %v786, 7
          %v788 = vsub.s32 0, %v787
          %v789 = vrot.slane %v779, %v788
          %v790 = vsel %vm707, %v785, 0.0
          %v791 = vsel %vm708, %v789, 0.0
          %v792 = vsel %vm709, %v785, 0.0
          %v793 = vsel %vm710, %v789, 0.0
          %v794 = vsel %vm711, %v785, 0.0
          %v795 = vsel %vm712, %v789, 0.0
          %v796 = vsel %vm713, %v785, 0.0
          %v797 = vsel %vm714, %v789, 0.0
          %v798 = vsel %vm715, %v785, 0.0
          %v799 = vsel %vm716, %v789, 0.0
          %v800 = vsel %vm717, %v785, 0.0
          %v801 = vsel %vm718, %v789, 0.0
          %v802 = vsel %vm719, %v785, 0.0
          %v803 = vsel %vm720, %v789, 0.0
          %v804 = vsel %vm721, %v785, 0.0
          %v805 = vsel %vm722, %v789, 0.0
          %v806 = vsel %vm723, %v785, 0.0
          %v807 = vsel %vm724, %v789, 0.0
          %v808 = vsel %vm725, %v785, 0.0
          %v809 = vsel %vm726, %v789, 0.0
          %v810 = vsel %vm727, %v785, 0.0
          %v811 = vsel %vm728, %v789, 0.0
          %v812 = vsel %vm729, %v785, 0.0
          %v813 = vsel %vm730, %v789, 0.0
          %v814 = vsel %vm731, %v785, 0.0
          %v815 = vsel %vm732, %v789, 0.0
          %v816 = vsel %vm733, %v785, 0.0
          %v817 = vsel %vm734, %v789, 0.0
          %v818 = vsel %vm735, %v785, 0.0
          %v819 = vsel %vm736, %v789, 0.0
          %v820 = vsel %vm737, %v785, 0.0
          %v821 = vsel %vm738, %v789, 0.0
          %v822 = vsel %vm739, %v785, 0.0
          %v823 = vsel %vm740, %v789, 0.0
          %v824 = vsel %vm741, %v785, 0.0
          %v825 = vsel %vm742, %v789, 0.0
          %v826 = vsel %vm743, %v785, 0.0
          %v827 = vsel %vm744, %v789, 0.0
          %v828 = vsel %vm745, %v785, 0.0
          %v829 = vsel %vm746, %v789, 0.0
          %v830 = vsel %vm747, %v785, 0.0
          %v831 = vsel %vm748, %v789, 0.0
          %v832 = vsel %vm749, %v785, 0.0
          %v833 = vsel %vm750, %v789, 0.0
          %v834 = vsel %vm751, %v785, 0.0
          %v835 = vsel %vm752, %v789, 0.0
          %v836 = vsel %vm753, %v785, 0.0
          %v837 = vsel %vm754, %v789, 0.0
          %v838 = vsel %vm755, %v785, 0.0
          %v839 = vsel %vm756, %v789, 0.0
          %v840 = vsel %vm757, %v785, 0.0
          %v841 = vsel %vm758, %v789, 0.0
          %v842 = vsel %vm759, %v785, 0.0
          %v843 = vsel %vm760, %v789, 0.0
          %v844 = vsel %vm761, %v785, 0.0
          %v845 = vsel %vm762, %v789, 0.0
          %v846 = vsel %vm763, %v785, 0.0
          %v847 = vsel %vm764, %v789, 0.0
          %v848 = vsel %vm765, %v785, 0.0
          %v849 = vsel %vm766, %v789, 0.0
          %v850 = vsel %vm767, %v785, 0.0
          %v851 = vsel %vm768, %v789, 0.0
          %v852 = vsel %vm769, %v785, 0.0
          %v853 = vsel %vm770, %v789, 0.0
          %v855 = vlaneseq
          %v856 = vshrl.u32 %v855, 7
          %v857 = vsub.s32 0, %v856
          %v858 = vrot.slane %v350, %v857
          %v859 = vlaneseq
          %v860 = vshrl.u32 %v859, 7
          %v861 = vsub.s32 2, %v860
          %v862 = vrot.slane %v350, %v861
          %v865 = vlaneseq
          %v866 = vshrl.u32 %v865, 7
          %v867 = vsub.s32 0, %v866
          %v868 = vrot.slane %v858, %v867
          %v869 = vlaneseq
          %v870 = vshrl.u32 %v869, 7
          %v871 = vsub.s32 0, %v870
          %v872 = vrot.slane %v862, %v871
          %v873 = vsel %vm643, %v868, %v790
          %v874 = vsel %vm644, %v872, %v791
          %v875 = vsel %vm645, %v868, %v792
          %v876 = vsel %vm646, %v872, %v793
          %v877 = vsel %vm647, %v868, %v794
          %v878 = vsel %vm648, %v872, %v795
          %v879 = vsel %vm649, %v868, %v796
          %v880 = vsel %vm650, %v872, %v797
          %v881 = vsel %vm651, %v868, %v798
          %v882 = vsel %vm652, %v872, %v799
          %v883 = vsel %vm653, %v868, %v800
          %v884 = vsel %vm654, %v872, %v801
          %v885 = vsel %vm655, %v868, %v802
          %v886 = vsel %vm656, %v872, %v803
          %v887 = vsel %vm657, %v868, %v804
          %v888 = vsel %vm658, %v872, %v805
          %v889 = vsel %vm659, %v868, %v806
          %v890 = vsel %vm660, %v872, %v807
          %v891 = vsel %vm661, %v868, %v808
          %v892 = vsel %vm662, %v872, %v809
          %v893 = vsel %vm663, %v868, %v810
          %v894 = vsel %vm664, %v872, %v811
          %v895 = vsel %vm665, %v868, %v812
          %v896 = vsel %vm666, %v872, %v813
          %v897 = vsel %vm667, %v868, %v814
          %v898 = vsel %vm668, %v872, %v815
          %v899 = vsel %vm669, %v868, %v816
          %v900 = vsel %vm670, %v872, %v817
          %v901 = vsel %vm671, %v868, %v818
          %v902 = vsel %vm672, %v872, %v819
          %v903 = vsel %vm673, %v868, %v820
          %v904 = vsel %vm674, %v872, %v821
          %v905 = vsel %vm675, %v868, %v822
          %v906 = vsel %vm676, %v872, %v823
          %v907 = vsel %vm677, %v868, %v824
          %v908 = vsel %vm678, %v872, %v825
          %v909 = vsel %vm679, %v868, %v826
          %v910 = vsel %vm680, %v872, %v827
          %v911 = vsel %vm681, %v868, %v828
          %v912 = vsel %vm682, %v872, %v829
          %v913 = vsel %vm683, %v868, %v830
          %v914 = vsel %vm684, %v872, %v831
          %v915 = vsel %vm685, %v868, %v832
          %v916 = vsel %vm686, %v872, %v833
          %v917 = vsel %vm687, %v868, %v834
          %v918 = vsel %vm688, %v872, %v835
          %v919 = vsel %vm689, %v868, %v836
          %v920 = vsel %vm690, %v872, %v837
          %v921 = vsel %vm691, %v868, %v838
          %v922 = vsel %vm692, %v872, %v839
          %v923 = vsel %vm693, %v868, %v840
          %v924 = vsel %vm694, %v872, %v841
          %v925 = vsel %vm695, %v868, %v842
          %v926 = vsel %vm696, %v872, %v843
          %v927 = vsel %vm697, %v868, %v844
          %v928 = vsel %vm698, %v872, %v845
          %v929 = vsel %vm699, %v868, %v846
          %v930 = vsel %vm700, %v872, %v847
          %v931 = vsel %vm701, %v868, %v848
          %v932 = vsel %vm702, %v872, %v849
          %v933 = vsel %vm703, %v868, %v850
          %v934 = vsel %vm704, %v872, %v851
          %v935 = vsel %vm705, %v868, %v852
          %v936 = vsel %vm706, %v872, %v853
          %v938 = vlaneseq
          %v939 = vshrl.u32 %v938, 7
          %v940 = vsub.s32 0, %v939
          %v941 = vrot.slane %v347, %v940
          %v942 = vlaneseq
          %v943 = vshrl.u32 %v942, 7
          %v944 = vsub.s32 2, %v943
          %v945 = vrot.slane %v347, %v944
          %v948 = vlaneseq
          %v949 = vshrl.u32 %v948, 7
          %v950 = vsub.s32 0, %v949
          %v951 = vrot.slane %v941, %v950
          %v952 = vlaneseq
          %v953 = vshrl.u32 %v952, 7
          %v954 = vsub.s32 0, %v953
          %v955 = vrot.slane %v945, %v954
          %v956 = vsel %vm579, %v951, %v873
          %v957 = vsel %vm580, %v955, %v874
          %v958 = vsel %vm581, %v951, %v875
          %v959 = vsel %vm582, %v955, %v876
          %v960 = vsel %vm583, %v951, %v877
          %v961 = vsel %vm584, %v955, %v878
          %v962 = vsel %vm585, %v951, %v879
          %v963 = vsel %vm586, %v955, %v880
          %v964 = vsel %vm587, %v951, %v881
          %v965 = vsel %vm588, %v955, %v882
          %v966 = vsel %vm589, %v951, %v883
          %v967 = vsel %vm590, %v955, %v884
          %v968 = vsel %vm591, %v951, %v885
          %v969 = vsel %vm592, %v955, %v886
          %v970 = vsel %vm593, %v951, %v887
          %v971 = vsel %vm594, %v955, %v888
          %v972 = vsel %vm595, %v951, %v889
          %v973 = vsel %vm596, %v955, %v890
          %v974 = vsel %vm597, %v951, %v891
          %v975 = vsel %vm598, %v955, %v892
          %v976 = vsel %vm599, %v951, %v893
          %v977 = vsel %vm600, %v955, %v894
          %v978 = vsel %vm601, %v951, %v895
          %v979 = vsel %vm602, %v955, %v896
          %v980 = vsel %vm603, %v951, %v897
          %v981 = vsel %vm604, %v955, %v898
          %v982 = vsel %vm605, %v951, %v899
          %v983 = vsel %vm606, %v955, %v900
          %v984 = vsel %vm607, %v951, %v901
          %v985 = vsel %vm608, %v955, %v902
          %v986 = vsel %vm609, %v951, %v903
          %v987 = vsel %vm610, %v955, %v904
          %v988 = vsel %vm611, %v951, %v905
          %v989 = vsel %vm612, %v955, %v906
          %v990 = vsel %vm613, %v951, %v907
          %v991 = vsel %vm614, %v955, %v908
          %v992 = vsel %vm615, %v951, %v909
          %v993 = vsel %vm616, %v955, %v910
          %v994 = vsel %vm617, %v951, %v911
          %v995 = vsel %vm618, %v955, %v912
          %v996 = vsel %vm619, %v951, %v913
          %v997 = vsel %vm620, %v955, %v914
          %v998 = vsel %vm621, %v951, %v915
          %v999 = vsel %vm622, %v955, %v916
          %v1000 = vsel %vm623, %v951, %v917
          %v1001 = vsel %vm624, %v955, %v918
          %v1002 = vsel %vm625, %v951, %v919
          %v1003 = vsel %vm626, %v955, %v920
          %v1004 = vsel %vm627, %v951, %v921
          %v1005 = vsel %vm628, %v955, %v922
          %v1006 = vsel %vm629, %v951, %v923
          %v1007 = vsel %vm630, %v955, %v924
          %v1008 = vsel %vm631, %v951, %v925
          %v1009 = vsel %vm632, %v955, %v926
          %v1010 = vsel %vm633, %v951, %v927
          %v1011 = vsel %vm634, %v955, %v928
          %v1012 = vsel %vm635, %v951, %v929
          %v1013 = vsel %vm636, %v955, %v930
          %v1014 = vsel %vm637, %v951, %v931
          %v1015 = vsel %vm638, %v955, %v932
          %v1016 = vsel %vm639, %v951, %v933
          %v1017 = vsel %vm640, %v955, %v934
          %v1018 = vsel %vm641, %v951, %v935
          %v1019 = vsel %vm642, %v955, %v936
          %v1021 = vlaneseq
          %v1022 = vshrl.u32 %v1021, 7
          %v1023 = vsub.s32 0, %v1022
          %v1024 = vrot.slane %v344, %v1023
          %v1025 = vlaneseq
          %v1026 = vshrl.u32 %v1025, 7
          %v1027 = vsub.s32 2, %v1026
          %v1028 = vrot.slane %v344, %v1027
          %v1031 = vlaneseq
          %v1032 = vshrl.u32 %v1031, 7
          %v1033 = vsub.s32 0, %v1032
          %v1034 = vrot.slane %v1024, %v1033
          %v1035 = vlaneseq
          %v1036 = vshrl.u32 %v1035, 7
          %v1037 = vsub.s32 0, %v1036
          %v1038 = vrot.slane %v1028, %v1037
          %v1039 = vsel %vm515, %v1034, %v956
          %v1040 = vsel %vm516, %v1038, %v957
          %v1041 = vsel %vm517, %v1034, %v958
          %v1042 = vsel %vm518, %v1038, %v959
          %v1043 = vsel %vm519, %v1034, %v960
          %v1044 = vsel %vm520, %v1038, %v961
          %v1045 = vsel %vm521, %v1034, %v962
          %v1046 = vsel %vm522, %v1038, %v963
          %v1047 = vsel %vm523, %v1034, %v964
          %v1048 = vsel %vm524, %v1038, %v965
          %v1049 = vsel %vm525, %v1034, %v966
          %v1050 = vsel %vm526, %v1038, %v967
          %v1051 = vsel %vm527, %v1034, %v968
          %v1052 = vsel %vm528, %v1038, %v969
          %v1053 = vsel %vm529, %v1034, %v970
          %v1054 = vsel %vm530, %v1038, %v971
          %v1055 = vsel %vm531, %v1034, %v972
          %v1056 = vsel %vm532, %v1038, %v973
          %v1057 = vsel %vm533, %v1034, %v974
          %v1058 = vsel %vm534, %v1038, %v975
          %v1059 = vsel %vm535, %v1034, %v976
          %v1060 = vsel %vm536, %v1038, %v977
          %v1061 = vsel %vm537, %v1034, %v978
          %v1062 = vsel %vm538, %v1038, %v979
          %v1063 = vsel %vm539, %v1034, %v980
          %v1064 = vsel %vm540, %v1038, %v981
          %v1065 = vsel %vm541, %v1034, %v982
          %v1066 = vsel %vm542, %v1038, %v983
          %v1067 = vsel %vm543, %v1034, %v984
          %v1068 = vsel %vm544, %v1038, %v985
          %v1069 = vsel %vm545, %v1034, %v986
          %v1070 = vsel %vm546, %v1038, %v987
          %v1071 = vsel %vm547, %v1034, %v988
          %v1072 = vsel %vm548, %v1038, %v989
          %v1073 = vsel %vm549, %v1034, %v990
          %v1074 = vsel %vm550, %v1038, %v991
          %v1075 = vsel %vm551, %v1034, %v992
          %v1076 = vsel %vm552, %v1038, %v993
          %v1077 = vsel %vm553, %v1034, %v994
          %v1078 = vsel %vm554, %v1038, %v995
          %v1079 = vsel %vm555, %v1034, %v996
          %v1080 = vsel %vm556, %v1038, %v997
          %v1081 = vsel %vm557, %v1034, %v998
          %v1082 = vsel %vm558, %v1038, %v999
          %v1083 = vsel %vm559, %v1034, %v1000
          %v1084 = vsel %vm560, %v1038, %v1001
          %v1085 = vsel %vm561, %v1034, %v1002
          %v1086 = vsel %vm562, %v1038, %v1003
          %v1087 = vsel %vm563, %v1034, %v1004
          %v1088 = vsel %vm564, %v1038, %v1005
          %v1089 = vsel %vm565, %v1034, %v1006
          %v1090 = vsel %vm566, %v1038, %v1007
          %v1091 = vsel %vm567, %v1034, %v1008
          %v1092 = vsel %vm568, %v1038, %v1009
          %v1093 = vsel %vm569, %v1034, %v1010
          %v1094 = vsel %vm570, %v1038, %v1011
          %v1095 = vsel %vm571, %v1034, %v1012
          %v1096 = vsel %vm572, %v1038, %v1013
          %v1097 = vsel %vm573, %v1034, %v1014
          %v1098 = vsel %vm574, %v1038, %v1015
          %v1099 = vsel %vm575, %v1034, %v1016
          %v1100 = vsel %vm576, %v1038, %v1017
          %v1101 = vsel %vm577, %v1034, %v1018
          %v1102 = vsel %vm578, %v1038, %v1019
          %s1103 = smul.u32 %s29, 2
          %s1104 = smul.addr %s1103, 8
          %s1105 = scalar_lea.vmem %s217, %s1104 [#allocation7]
          %v1106 = vld [vmem:[%s1105] sm:$0xff]
          %v1107 = vld [vmem:[%s1105 + $0x8] sm:$0xff]
          %v1108 = vld [vmem:[%s240] sm:$0xff]
          %v1109 = vld [vmem:[%s240 + $0x8] sm:$0xff]
          %1110 = vmatprep.subr.mxu0 %v1070
          %1111 = vmatpush1.msra.mxu0 %v1069
          %1112 = vmatprep.subr.mxu0 %v1068
          %1113 = vmatpush1.msra.mxu0 %v1067
          %1114 = vmatprep.subr.mxu0 %v1066
          %1115 = vmatpush1.msra.mxu0 %v1065
          %1116 = vmatprep.subr.mxu0 %v1064
          %1117 = vmatpush1.msra.mxu0 %v1063
          %1118 = vmatprep.subr.mxu0 %v1062
          %1119 = vmatpush1.msra.mxu0 %v1061
          %1120 = vmatprep.subr.mxu0 %v1060
          %1121 = vmatpush1.msra.mxu0 %v1059
          %1122 = vmatprep.subr.mxu0 %v1058
          %1123 = vmatpush1.msra.mxu0 %v1057
          %1124 = vmatprep.subr.mxu0 %v1056
          %1125 = vmatpush1.msra.mxu0 %v1055
          %1126 = vmatprep.subr.mxu0 %v1054
          %1127 = vmatpush1.msra.mxu0 %v1053
          %1128 = vmatprep.subr.mxu0 %v1052
          %1129 = vmatpush1.msra.mxu0 %v1051
          %1130 = vmatprep.subr.mxu0 %v1050
          %1131 = vmatpush1.msra.mxu0 %v1049
          %1132 = vmatprep.subr.mxu0 %v1048
          %1133 = vmatpush1.msra.mxu0 %v1047
          %1134 = vmatprep.subr.mxu0 %v1046
          %1135 = vmatpush1.msra.mxu0 %v1045
          %1136 = vmatprep.subr.mxu0 %v1044
          %1137 = vmatpush1.msra.mxu0 %v1043
          %1138 = vmatprep.subr.mxu0 %v1042
          %1139 = vmatpush1.msra.mxu0 %v1041
          %1140 = vmatprep.subr.mxu0 %v1040
          %1141 = vmatpush1.msra.mxu0 %v1039
          %1142 = vmatprep.subr.mxu0 %v1102
          %1143 = vmatpush2.msra.mxu0 %v1101
          %1144 = vmatprep.subr.mxu0 %v1100
          %1145 = vmatpush2.msra.mxu0 %v1099
          %1146 = vmatprep.subr.mxu0 %v1098
          %1147 = vmatpush2.msra.mxu0 %v1097
          %1148 = vmatprep.subr.mxu0 %v1096
          %1149 = vmatpush2.msra.mxu0 %v1095
          %1150 = vmatprep.subr.mxu0 %v1094
          %1151 = vmatpush2.msra.mxu0 %v1093
          %1152 = vmatprep.subr.mxu0 %v1092
          %1153 = vmatpush2.msra.mxu0 %v1091
          %1154 = vmatprep.subr.mxu0 %v1090
          %1155 = vmatpush2.msra.mxu0 %v1089
          %1156 = vmatprep.subr.mxu0 %v1088
          %1157 = vmatpush2.msra.mxu0 %v1087
          %1158 = vmatprep.subr.mxu0 %v1086
          %1159 = vmatpush2.msra.mxu0 %v1085
          %1160 = vmatprep.subr.mxu0 %v1084
          %1161 = vmatpush2.msra.mxu0 %v1083
          %1162 = vmatprep.subr.mxu0 %v1082
          %1163 = vmatpush2.msra.mxu0 %v1081
          %1164 = vmatprep.subr.mxu0 %v1080
          %1165 = vmatpush2.msra.mxu0 %v1079
          %1166 = vmatprep.subr.mxu0 %v1078
          %1167 = vmatpush2.msra.mxu0 %v1077
          %1168 = vmatprep.subr.mxu0 %v1076
          %1169 = vmatpush2.msra.mxu0 %v1075
          %1170 = vmatprep.subr.mxu0 %v1074
          %1171 = vmatpush2.msra.mxu0 %v1073
          %1172 = vmatprep.subr.mxu0 %v1072
          %1173 = vmatpush2.msra.mxu0 %v1071
          %1174 = vmatprep.mubr.f32.mxu0 %v1107
          %1175 = vmatmul.mubr.f32.gmra.mxu0 %v1106
          %v1176 = vpop.f32.mrf.mxu0
          %v1177 = vadd.f32 0.0, %v1176
          %v1178 = vpop.f32.mrf.mxu0
          %v1179 = vadd.f32 0.0, %v1178
          %1180 = vdwg.mxu0
          %v1181 = vadd.f32 %v1108, %v1177
          %v1182 = vadd.f32 %v1109, %v1179
          %1183 = vst [vmem:[%s240] sm:$0xff] %v1181
          %1184 = vst [vmem:[%s240 + $0x8] sm:$0xff] %v1182
        $region52: #{tpu_custom_call.1} parent=31 // pred_fallthru
          _
        %s1185 = sand.u32 %s124, 1
        %s1186 = scalar_lea.sflag [#allocation4], %s1185
        %s1187 = sand.u32 %s124, 1
        %s1188 = smul.addr %s1187, 16
        %s1189 = scalar_lea.vmem [#allocation9], %s1188
        // Predicated region
        $region53: #{tpu_custom_call.1} parent=31 // pred_check
          %p1190 = pneg %p134
        $region54: #{tpu_custom_call.1} parent=31 // pred_check_branch
          %1192 = sbr.rel (%p1190) target = $region56
        $region55: #{tpu_custom_call.1} parent=31 // pred_region
          %s1193 = smul.u32 2, %s28
          %s1195 = ssub.s32 256, 256
          %1196 = vsyncadd %s1186, %s1195
          %s1197 = smul.addr %s27, 2
          %s1198 = sadd.s32 %s1193, %s1197
          %s1199 = smul.addr %s1198, 128
          %s1200 = scalar_lea.hbm %s3, %s1199
          %s1202 = sshll.u32 %s1189, 4
          %s1203 = int_to_ptr.vmem [resolvable:$true] %s1202
          %1205 = dma.vmem_to_hbm [thread:$0]  %s1203, 256, %s1200, %s1186
        $region56: #{tpu_custom_call.1} parent=31 // pred_fallthru
          _
      $region32: #{tpu_custom_call.1} parent=5 // pred_fallthru
        _
      %p1206 = scmp.le.s32.totalorder 2, %s17
      // Predicated region
      $region57: #{tpu_custom_call.1} parent=5 // pred_check
        %p1207 = pneg %p1206
      $region58: #{tpu_custom_call.1} parent=5 // pred_check_branch
        %1209 = sbr.rel (%p1207) target = $region60
      $region59: #{tpu_custom_call.1} parent=5 // pred_region
        %s1210 = ssub.s32 %s17, 2
        // Predicated region
        $region61: #{tpu_custom_call.1} parent=59 // pred_check
          %p1211 = pneg %p140
        $region62: #{tpu_custom_call.1} parent=59 // pred_check_branch
          %1213 = sbr.rel (%p1211) target = $region64
        $region63: #{tpu_custom_call.1} parent=59 // pred_region
          %s1214 = sand.u32 %s125, 1
          %s1215 = scalar_lea.sflag [#allocation4], %s1214
          %s1216 = sand.u32 %s125, 1
          %s1217 = smul.addr %s1216, 16
          %s1218 = scalar_lea.vmem [#allocation9], %s1217
          %1219 = dma.done %s1215, 256
        $region64: #{tpu_custom_call.1} parent=59 // pred_fallthru
          _
      $region60: #{tpu_custom_call.1} parent=5 // pred_fallthru
        _
    $region6: #{tpu_custom_call.1} parent=1 // loop_footer
      %s21 = sadd.s32 1, %s17
    $region7: #{tpu_custom_call.1} parent=1 // loop_footer_branch
      %16 = sbr.rel target = $region3
    $region8: #{tpu_custom_call.1} parent=1 // loop_exit
      _
    %1220 = vsyncpa [#allocation3], 1
    %s1221 = scalar_lea.sflag [#allocation3], 1
    %1222 = vsyncpa %s1221, 1
    %1223 = vsyncpa [#allocation8], 1
    %s1224 = scalar_lea.sflag [#allocation8], 1
    %1225 = vsyncpa %s1224, 1
    %1226 = vsyncpa [#allocation4], 1
    %s1227 = scalar_lea.sflag [#allocation4], 1
    %1228 = vsyncpa %s1227, 1
    %1229 = vsyncpa [#allocation5], 1
    %s1230 = scalar_lea.sflag [#allocation5], 1
    %1231 = vsyncpa %s1230, 1

</llo_original>
